<compile_context>
chip_gen: v6e
topology: v6e:2x2x1
jax: 0.10.0
libtpu: 0.0.40
codegen_flags: <defaults>
</compile_context>

<pallas_src>
import functools

import jax
import jax.numpy as jnp
import numpy as np
from jax.experimental import pallas as pl
from jax.experimental.pallas import tpu as pltpu

EPS = 1e-5


# ----------------------------- kernel ----------------------------------------
def _bottleneck_kernel(x_ref, s1_ref, b1_ref, wcat_ref, b2_ref, w2T_ref,
                       b3_ref, w3T_ref, out_ref, scr_ref, *,
                       H, W, Cout, bn1_scale_folded, im2col_dtype):
    """images_per_block images per grid step; everything is (channels, pixels).

    x_ref:    (ipb, Cin, M)        M = H*W on the lane axis, f32
    s1,b1:    (Cin, 1)             bn1 scale/shift (s1 unused when folded into wcat)
    wcat_ref: (Cout+planes, Cin)   [shortcut_w ; conv1_w*bn2_scale]^T, bf16
    b2:       (planes, 1)          bn2 shift
    w2T_ref:  (planes, 9*planes)   (conv2_w * bn3_scale) im2col-matrix^T, bf16
    b3:       (planes, 1)          bn3 shift
    w3T_ref:  (Cout, planes)       conv3_w^T, bf16
    out_ref:  (ipb, Cout, M)       f32
    scr_ref:  (9*planes, M)        im2col scratch (bf16 on v6e/v7x, f32 on v5e)
    """
    planes = w2T_ref.shape[0]
    ipb, _, M = x_ref.shape

    # ---- hoisted per-pixel boundary predicates (shared by all taps & images) ----
    pos = jax.lax.broadcasted_iota(jnp.int32, (1, M), 1)       # flattened pixel index
    if (W & (W - 1)) == 0:
        xi = pos & (W - 1)                                      # x coordinate (pow-2 W)
    else:
        # TODO(synk): non-power-of-2 widths rely on vector remainder lowering.
        xi = jax.lax.rem(pos, W)
    up_ok = pos >= W                   # y-1 >= 0 (also kills image wrap)
    down_ok = pos < (H - 1) * W        # y+1 <  H
    left_ok = xi >= 1                  # x-1 >= 0 (also kills row wrap)
    right_ok = xi <= W - 2             # x+1 <  W
    row_masks = {-1: up_ok, 0: None, 1: down_ok}
    col_masks = {-1: left_ok, 0: None, 1: right_ok}
    tap_masks = []
    for dy in (-1, 0, 1):
        for dx in (-1, 0, 1):
            rm, cm = row_masks[dy], col_masks[dx]
            if rm is None:
                tap_masks.append(cm)
            elif cm is None:
                tap_masks.append(rm)
            else:
                tap_masks.append(jnp.logical_and(rm, cm))

    zero = jnp.zeros((), im2col_dtype)

    for b in range(ipb):
        # ---- bn1 + relu (scale optionally folded into the first matmul weights) ----
        x = x_ref[b]                                             # (Cin, M), f32
        if bn1_scale_folded:
            pre = jnp.maximum(x + b1_ref[...], 0.0)
        else:
            pre = jnp.maximum(x * s1_ref[...] + b1_ref[...], 0.0)

        # ---- fused [shortcut ; conv1*bn2_scale] : one MXU pass ----
        hcat = jnp.dot(wcat_ref[...], pre.astype(jnp.bfloat16),
                       preferred_element_type=jnp.float32)       # (Cout+planes, M)
        shortcut = hcat[:Cout]                                   # sublane-tile-aligned split
        h1 = jnp.maximum(hcat[Cout:] + b2_ref[...], 0.0)         # bn2 shift + relu

        # ---- 3x3 conv (pad=1, stride=1): im2col taps written into VMEM scratch ----
        h1c = h1.astype(im2col_dtype)
        t = 0
        for dy in (-1, 0, 1):
            for dx in (-1, 0, 1):
                k = dy * W + dx
                # shifted[p] = h1c[p + k]  (lane shift; wraps are masked below)
                shifted = jnp.roll(h1c, -k, axis=1) if k else h1c
                m = tap_masks[t]
                if m is not None:
                    shifted = jnp.where(m, shifted, zero)
                scr_ref[pl.ds(t * planes, planes), :] = shifted
                t += 1
        im2col = scr_ref[...]
        if im2col.dtype != jnp.bfloat16:
            im2col = im2col.astype(jnp.bfloat16)
        h2 = jnp.dot(w2T_ref[...], im2col,
                     preferred_element_type=jnp.float32)         # (planes, M), bn3 scale folded
        h3 = jnp.maximum(h2 + b3_ref[...], 0.0)                  # bn3 shift + relu

        # ---- conv3 (1x1) + residual add; lane-dense unmasked store ----
        out = jnp.dot(w3T_ref[...], h3.astype(jnp.bfloat16),
                      preferred_element_type=jnp.float32) + shortcut
        out_ref[b] = out.astype(out_ref.dtype)


# ----------------------------- host-side helpers ------------------------------
def _bn_scale_shift(gamma, beta, mean, var):
    scale = gamma / jnp.sqrt(var + EPS)
    shift = beta - mean * scale
    return scale.astype(jnp.float32), shift.astype(jnp.float32)


def _device_traits():
    """(tensorcores_per_chip, vpu_has_bf16) with conservative fallbacks."""
    try:
        kind = jax.devices()[0].device_kind.lower()
    except Exception:
        kind = ""
    tc_per_chip = 2 if "v7" in kind else 1       # v7x has 2 TCs per chip
    bf16_vpu = "v5" not in kind                  # v5e VPU has no bf16 path
    return tc_per_chip, bf16_vpu


def fold_params(params):
    """Run ONCE at init (inference): fold BN scales / fuse weights on the host."""
    if params.get("wsc") is None:
        # TODO(synk): identity-shortcut variant (stride==1 and in_planes==4*planes).
        raise NotImplementedError("only the conv-shortcut variant is implemented")

    in_planes, planes = params["w1"].shape

    s1, b1 = _bn_scale_shift(params["g1"], params["bt1"], params["m1"], params["v1"])
    s2, b2 = _bn_scale_shift(params["g2"], params["bt2"], params["m2"], params["v2"])
    s3, b3 = _bn_scale_shift(params["g3"], params["bt3"], params["m3"], params["v3"])

    w1f = params["w1"] * s2[None, :]                       # conv1 absorbs bn2 scale
    wsc = params["wsc"]

    # Guarded bn1-scale fold: relu(s*x+b) = s*relu(x + b/s) only when s > 0.
    bn1_scale_folded = bool(jnp.all(s1 > 0))
    if bn1_scale_folded:
        w1f = w1f * s1[:, None]
        wsc = wsc * s1[:, None]
        b1 = b1 / s1

    # Shortcut rows FIRST so the in-kernel split is sublane-tile aligned.
    wcatT = jnp.concatenate([wsc, w1f], axis=1).T.astype(jnp.bfloat16)  # (Cout+planes, Cin)
    w2f = params["w2"] * s3[None, None, None, :]           # (3,3,planes,planes) HWIO, bn3 folded
    w2T = w2f.reshape(9 * planes, planes).T.astype(jnp.bfloat16)        # (planes, 9*planes)
    w3T = params["w3"].T.astype(jnp.bfloat16)                           # (Cout, planes)

    ops = {
        "s1": s1.reshape(in_planes, 1), "b1": b1.reshape(in_planes, 1),
        "wcatT": wcatT, "b2": b2.reshape(planes, 1),
        "w2T": w2T, "b3": b3.reshape(planes, 1), "w3T": w3T,
    }
    return ops, bn1_scale_folded


@functools.partial(jax.jit,
                   static_argnames=("bn1_scale_folded", "images_per_block", "bf16_im2col"))
def _forward(x_nchw, ops, *, bn1_scale_folded, images_per_block, bf16_im2col):
    N, Cin, H, W = x_nchw.shape
    M = H * W
    planes = ops["w2T"].shape[0]
    Cout = ops["w3T"].shape[0]
    ipb = images_per_block
    assert N % ipb == 0
    im2col_dtype = jnp.bfloat16 if bf16_im2col else jnp.float32

    x3 = x_nchw.reshape(N, Cin, M)            # free view of NCHW (no transpose)

    kern = functools.partial(_bottleneck_kernel, H=H, W=W, Cout=Cout,
                             bn1_scale_folded=bn1_scale_folded,
                             im2col_dtype=im2col_dtype)

    def _const_spec(arr):
        # Whole (small) array, resident every step (constant index map).
        # TODO(synk): pipeline_mode=pl.Buffered(1) to single-buffer these weights.
        return pl.BlockSpec(arr.shape, lambda n: (0, 0))

    flops = 2 * N * M * (Cin * (planes + Cout) + 9 * planes * planes + planes * Cout)
    bytes_accessed = (x3.size * 4 + N * M * Cout * 4
                      + (ops["wcatT"].size + ops["w2T"].size + ops["w3T"].size) * 2
                      + (ops["s1"].size + ops["b1"].size + ops["b2"].size + ops["b3"].size) * 4)

    out3 = pl.pallas_call(
        kern,
        out_shape=jax.ShapeDtypeStruct((N, Cout, M), x_nchw.dtype),
        grid=(N // ipb,),
        in_specs=[
            pl.BlockSpec((ipb, Cin, M), lambda n: (n, 0, 0)),
            _const_spec(ops["s1"]), _const_spec(ops["b1"]),
            _const_spec(ops["wcatT"]), _const_spec(ops["b2"]),
            _const_spec(ops["w2T"]), _const_spec(ops["b3"]),
            _const_spec(ops["w3T"]),
        ],
        out_specs=pl.BlockSpec((ipb, Cout, M), lambda n: (n, 0, 0)),
        scratch_shapes=[pltpu.VMEM((9 * planes, M), im2col_dtype)],
        compiler_params=pltpu.CompilerParams(
            dimension_semantics=("parallel",),        # v7x: two TCs split the batch grid
            vmem_limit_bytes=32 * 1024 * 1024),
        cost_estimate=pl.CostEstimate(
            flops=int(flops), transcendentals=0, bytes_accessed=int(bytes_accessed)),
    )(x3, ops["s1"], ops["b1"], ops["wcatT"], ops["b2"],
      ops["w2T"], ops["b3"], ops["w3T"])

    return out3.reshape(N, Cout, H, W)        # free view back to NCHW


def preact_bottleneck(x_nchw, folded):
    """x_nchw: (N, Cin, H, W) f32 -> (N, 4*planes, H, W) f32 (eval-mode BatchNorm)."""
    ops, bn1_scale_folded = folded
    N, _, H, W = x_nchw.shape
    M = H * W

    tc_per_chip, bf16_vpu = _device_traits()
    if tc_per_chip > 1 and N > 1:
        images_per_block = 1                  # keep >=2 parallel steps for v7x's 2 TCs
    else:
        # Single TensorCore: merge the (tiny) batch into one grid step; cap the
        # packed footprint for larger batches.  TODO(synk): re-derive for real shapes.
        images_per_block = N
        while images_per_block > 1 and (N % images_per_block or images_per_block * M > 4096):
            images_per_block -= 1

    return _forward(x_nchw, ops, bn1_scale_folded=bn1_scale_folded,
                    images_per_block=images_per_block, bf16_im2col=bf16_vpu)


# ------------------------- pure-JAX reference ---------------------------------
def _reference(x_nchw, p):
    x = jnp.transpose(x_nchw, (0, 2, 3, 1))                 # NCHW -> NHWC

    def bn(x, g, b, m, v):
        return (x - m) / jnp.sqrt(v + EPS) * g + b

    def conv1x1(x, w):                                      # w: (Cin, Cout)
        return jax.lax.conv_general_dilated(
            x, w.reshape(1, 1, *w.shape), (1, 1), "VALID",
            dimension_numbers=("NHWC", "HWIO", "NHWC"))

    pre = jax.nn.relu(bn(x, p["g1"], p["bt1"], p["m1"], p["v1"]))
    shortcut = conv1x1(pre, p["wsc"])
    h = conv1x1(pre, p["w1"])
    h = jax.nn.relu(bn(h, p["g2"], p["bt2"], p["m2"], p["v2"]))
    h = jax.lax.conv_general_dilated(
        h, p["w2"], (1, 1), ((1, 1), (1, 1)),
        dimension_numbers=("NHWC", "HWIO", "NHWC"))
    h = jax.nn.relu(bn(h, p["g3"], p["bt3"], p["m3"], p["v3"]))
    out = conv1x1(h, p["w3"]) + shortcut
    return jnp.transpose(out, (0, 3, 1, 2))                 # NHWC -> NCHW


def _init_params(key, in_planes, planes, expansion=4):
    cout = expansion * planes
    ks = jax.random.split(key, 16)
    u = lambda k, s: jax.random.normal(k, s, jnp.float32) * 0.1
    params = {
        "g1": 1.0 + 0.1 * jax.random.normal(ks[0], (in_planes,)),
        "bt1": 0.1 * jax.random.normal(ks[1], (in_planes,)),
        "m1": 0.1 * jax.random.normal(ks[2], (in_planes,)),
        "v1": 0.5 + jax.random.uniform(ks[3], (in_planes,)),
        "w1": u(ks[4], (in_planes, planes)),
        "g2": 1.0 + 0.1 * jax.random.normal(ks[5], (planes,)),
        "bt2": 0.1 * jax.random.normal(ks[6], (planes,)),
        "m2": 0.1 * jax.random.normal(ks[7], (planes,)),
        "v2": 0.5 + jax.random.uniform(ks[8], (planes,)),
        "w2": u(ks[9], (3, 3, planes, planes)),
        "g3": 1.0 + 0.1 * jax.random.normal(ks[10], (planes,)),
        "bt3": 0.1 * jax.random.normal(ks[11], (planes,)),
        "m3": 0.1 * jax.random.normal(ks[12], (planes,)),
        "v3": 0.5 + jax.random.uniform(ks[13], (planes,)),
        "w3": u(ks[14], (planes, cout)),
        "wsc": u(ks[15], (in_planes, cout)),
    }
    return {k: v.astype(jnp.float32) for k, v in params.items()}


if __name__ == "__main__":
    key = jax.random.PRNGKey(0)
    k_x, k_p = jax.random.split(key)

    N, C, Hs, Ws = 2, 4, 16, 16               # PyTorch NCHW input shape (2, 4, 16, 16)
    in_planes, planes = C, 4                  # stride=1, in_planes != 4*planes -> conv shortcut

    x_nchw = jax.random.normal(k_x, (N, C, Hs, Ws), jnp.float32)
    params = _init_params(k_p, in_planes, planes)

    folded = fold_params(params)              # host-side folding once at init
    out = preact_bottleneck(x_nchw, folded)
    jax.block_until_ready(out)

    ref = _reference(x_nchw, params)
    assert out.shape == (N, 4 * planes, Hs, Ws)
    # bf16 MXU inputs (f32 accumulation) -> slightly looser tolerance than pure f32.
    np.testing.assert_allclose(np.asarray(out), np.asarray(ref), rtol=2e-2, atol=2e-2)
    print("KERNEL_OK")
</pallas_src>

<mosaic_0001>
module attributes {stable_mosaic.version = 11 : i64} {
  func.func @_bottleneck_kernel(%arg0: i32, %arg1: memref<2x4x256xf32, #tpu.memory_space<vmem>>, %arg2: memref<4x1xf32, #tpu.memory_space<vmem>>, %arg3: memref<4x1xf32, #tpu.memory_space<vmem>>, %arg4: memref<20x4xbf16, #tpu.memory_space<vmem>>, %arg5: memref<4x1xf32, #tpu.memory_space<vmem>>, %arg6: memref<4x36xbf16, #tpu.memory_space<vmem>>, %arg7: memref<4x1xf32, #tpu.memory_space<vmem>>, %arg8: memref<16x4xbf16, #tpu.memory_space<vmem>>, %arg9: memref<2x16x256xf32, #tpu.memory_space<vmem>>, %arg10: memref<36x256xbf16, #tpu.memory_space<vmem>>) attributes {dimension_semantics = [#tpu.dimension_semantics<parallel>], iteration_bounds = array<i64: 1>, scalar_prefetch = 0 : i64, scratch_operands = 1 : i64, tpu.core_type = #tpu.core_type<tc>, window_params = [{transform_indices = @transform_0, window_bounds = array<i64: 2, 4, 256>}, {pipeline_mode = #tpu.pipeline_mode<synchronous>, transform_indices = @transform_1, window_bounds = array<i64: 4, 1>}, {pipeline_mode = #tpu.pipeline_mode<synchronous>, transform_indices = @transform_2, window_bounds = array<i64: 4, 1>}, {pipeline_mode = #tpu.pipeline_mode<synchronous>, transform_indices = @transform_3, window_bounds = array<i64: 20, 4>}, {pipeline_mode = #tpu.pipeline_mode<synchronous>, transform_indices = @transform_4, window_bounds = array<i64: 4, 1>}, {pipeline_mode = #tpu.pipeline_mode<synchronous>, transform_indices = @transform_5, window_bounds = array<i64: 4, 36>}, {pipeline_mode = #tpu.pipeline_mode<synchronous>, transform_indices = @transform_6, window_bounds = array<i64: 4, 1>}, {pipeline_mode = #tpu.pipeline_mode<synchronous>, transform_indices = @transform_7, window_bounds = array<i64: 16, 4>}, {transform_indices = @transform_8, window_bounds = array<i64: 2, 16, 256>}]} {
    %0 = tpu.iota {dimensions = array<i32: 1>} : vector<1x256xi32>
    %c15_i32 = arith.constant 15 : i32
    %1 = vector.broadcast %c15_i32 : i32 to vector<1x256xi32>
    %2 = arith.andi %0, %1 : vector<1x256xi32>
    %c16_i32 = arith.constant 16 : i32
    %3 = vector.broadcast %c16_i32 : i32 to vector<1x256xi32>
    %4 = arith.cmpi sge, %0, %3 : vector<1x256xi32>
    %c240_i32 = arith.constant 240 : i32
    %5 = vector.broadcast %c240_i32 : i32 to vector<1x256xi32>
    %6 = arith.cmpi slt, %0, %5 : vector<1x256xi32>
    %c1_i32 = arith.constant 1 : i32
    %7 = vector.broadcast %c1_i32 : i32 to vector<1x256xi32>
    %8 = arith.cmpi sge, %2, %7 : vector<1x256xi32>
    %c14_i32 = arith.constant 14 : i32
    %9 = vector.broadcast %c14_i32 : i32 to vector<1x256xi32>
    %10 = arith.cmpi sle, %2, %9 : vector<1x256xi32>
    %11 = arith.andi %4, %8 : vector<1x256xi1>
    %12 = arith.andi %4, %10 : vector<1x256xi1>
    %13 = arith.andi %6, %8 : vector<1x256xi1>
    %14 = arith.andi %6, %10 : vector<1x256xi1>
    %c0 = arith.constant 0 : index
    %c0_0 = arith.constant 0 : index
    %c0_1 = arith.constant 0 : index
    %15 = vector.load %arg1[%c0, %c0_0, %c0_1] : memref<2x4x256xf32, #tpu.memory_space<vmem>>, vector<1x4x256xf32>
    %16 = vector.shape_cast %15 : vector<1x4x256xf32> to vector<4x256xf32>
    %c0_2 = arith.constant 0 : index
    %c0_3 = arith.constant 0 : index
    %17 = vector.load %arg3[%c0_2, %c0_3] : memref<4x1xf32, #tpu.memory_space<vmem>>, vector<4x1xf32>
    %18 = vector.broadcast %17 : vector<4x1xf32> to vector<4x256xf32>
    %19 = arith.addf %16, %18 : vector<4x256xf32>
    %cst = arith.constant 0.000000e+00 : f32
    %20 = vector.broadcast %cst : f32 to vector<4x256xf32>
    %21 = arith.maximumf %19, %20 : vector<4x256xf32>
    %c0_4 = arith.constant 0 : index
    %c0_5 = arith.constant 0 : index
    %22 = vector.load %arg4[%c0_4, %c0_5] : memref<20x4xbf16, #tpu.memory_space<vmem>>, vector<20x4xbf16>
    %23 = arith.truncf %21 : vector<4x256xf32> to vector<4x256xbf16>
    %cst_6 = arith.constant dense<0.000000e+00> : vector<20x256xf32>
    %24 = tpu.matmul %22, %23, %cst_6 {dimension_numbers = #tpu.dot_dimension_numbers<[1], [0], [0], [1], [0, 0, 1, 1], [], []>} : vector<20x4xbf16>, vector<4x256xbf16>, vector<20x256xf32> -> vector<20x256xf32>
    %25 = vector.extract_strided_slice %24 {offsets = [0, 0], sizes = [16, 256], strides = [1, 1]} : vector<20x256xf32> to vector<16x256xf32>
    %26 = vector.extract_strided_slice %24 {offsets = [16, 0], sizes = [4, 256], strides = [1, 1]} : vector<20x256xf32> to vector<4x256xf32>
    %c0_7 = arith.constant 0 : index
    %c0_8 = arith.constant 0 : index
    %27 = vector.load %arg5[%c0_7, %c0_8] : memref<4x1xf32, #tpu.memory_space<vmem>>, vector<4x1xf32>
    %28 = vector.broadcast %27 : vector<4x1xf32> to vector<4x256xf32>
    %29 = arith.addf %26, %28 : vector<4x256xf32>
    %cst_9 = arith.constant 0.000000e+00 : f32
    %30 = vector.broadcast %cst_9 : f32 to vector<4x256xf32>
    %31 = arith.maximumf %29, %30 : vector<4x256xf32>
    %32 = arith.truncf %31 : vector<4x256xf32> to vector<4x256xbf16>
    %33 = vector.extract_strided_slice %32 {offsets = [0, 239], sizes = [4, 17], strides = [1, 1]} : vector<4x256xbf16> to vector<4x17xbf16>
    %34 = vector.extract_strided_slice %32 {offsets = [0, 0], sizes = [4, 239], strides = [1, 1]} : vector<4x256xbf16> to vector<4x239xbf16>
    %35 = tpu.concatenate %33, %34 in 1 : vector<4x17xbf16>, vector<4x239xbf16> -> vector<4x256xbf16>
    %cst_10 = arith.constant 0.000000e+00 : bf16
    %36 = vector.shape_cast %11 : vector<1x256xi1> to vector<1x256xi1>
    %37 = vector.broadcast %36 : vector<1x256xi1> to vector<4x256xi1>
    %38 = vector.broadcast %cst_10 : bf16 to vector<4x256xbf16>
    %39 = arith.select %37, %35, %38 : vector<4x256xi1>, vector<4x256xbf16>
    %c0_11 = arith.constant 0 : index
    %c0_12 = arith.constant 0 : index
    %40 = vector.load %arg10[%c0_11, %c0_12] : memref<36x256xbf16, #tpu.memory_space<vmem>>, vector<4x256xbf16>
    tpu.vector_store %arg10[%c0_11, %c0_12], %39 {strides = array<i32>} : memref<36x256xbf16, #tpu.memory_space<vmem>>, vector<4x256xbf16>,
    %41 = vector.extract_strided_slice %32 {offsets = [0, 240], sizes = [4, 16], strides = [1, 1]} : vector<4x256xbf16> to vector<4x16xbf16>
    %42 = vector.extract_strided_slice %32 {offsets = [0, 0], sizes = [4, 240], strides = [1, 1]} : vector<4x256xbf16> to vector<4x240xbf16>
    %43 = tpu.concatenate %41, %42 in 1 : vector<4x16xbf16>, vector<4x240xbf16> -> vector<4x256xbf16>
    %cst_13 = arith.constant 0.000000e+00 : bf16
    %44 = vector.shape_cast %4 : vector<1x256xi1> to vector<1x256xi1>
    %45 = vector.broadcast %44 : vector<1x256xi1> to vector<4x256xi1>
    %46 = vector.broadcast %cst_13 : bf16 to vector<4x256xbf16>
    %47 = arith.select %45, %43, %46 : vector<4x256xi1>, vector<4x256xbf16>
    %c4 = arith.constant 4 : index
    %c0_14 = arith.constant 0 : index
    %48 = vector.load %arg10[%c4, %c0_14] : memref<36x256xbf16, #tpu.memory_space<vmem>>, vector<4x256xbf16>
    tpu.vector_store %arg10[%c4, %c0_14], %47 {strides = array<i32>} : memref<36x256xbf16, #tpu.memory_space<vmem>>, vector<4x256xbf16>,
    %49 = vector.extract_strided_slice %32 {offsets = [0, 241], sizes = [4, 15], strides = [1, 1]} : vector<4x256xbf16> to vector<4x15xbf16>
    %50 = vector.extract_strided_slice %32 {offsets = [0, 0], sizes = [4, 241], strides = [1, 1]} : vector<4x256xbf16> to vector<4x241xbf16>
    %51 = tpu.concatenate %49, %50 in 1 : vector<4x15xbf16>, vector<4x241xbf16> -> vector<4x256xbf16>
    %cst_15 = arith.constant 0.000000e+00 : bf16
    %52 = vector.shape_cast %12 : vector<1x256xi1> to vector<1x256xi1>
    %53 = vector.broadcast %52 : vector<1x256xi1> to vector<4x256xi1>
    %54 = vector.broadcast %cst_15 : bf16 to vector<4x256xbf16>
    %55 = arith.select %53, %51, %54 : vector<4x256xi1>, vector<4x256xbf16>
    %c8 = arith.constant 8 : index
    %c0_16 = arith.constant 0 : index
    %56 = vector.load %arg10[%c8, %c0_16] : memref<36x256xbf16, #tpu.memory_space<vmem>>, vector<4x256xbf16>
    tpu.vector_store %arg10[%c8, %c0_16], %55 {strides = array<i32>} : memref<36x256xbf16, #tpu.memory_space<vmem>>, vector<4x256xbf16>,
    %57 = vector.extract_strided_slice %32 {offsets = [0, 255], sizes = [4, 1], strides = [1, 1]} : vector<4x256xbf16> to vector<4x1xbf16>
    %58 = vector.extract_strided_slice %32 {offsets = [0, 0], sizes = [4, 255], strides = [1, 1]} : vector<4x256xbf16> to vector<4x255xbf16>
    %59 = tpu.concatenate %57, %58 in 1 : vector<4x1xbf16>, vector<4x255xbf16> -> vector<4x256xbf16>
    %cst_17 = arith.constant 0.000000e+00 : bf16
    %60 = vector.shape_cast %8 : vector<1x256xi1> to vector<1x256xi1>
    %61 = vector.broadcast %60 : vector<1x256xi1> to vector<4x256xi1>
    %62 = vector.broadcast %cst_17 : bf16 to vector<4x256xbf16>
    %63 = arith.select %61, %59, %62 : vector<4x256xi1>, vector<4x256xbf16>
    %c12 = arith.constant 12 : index
    %c0_18 = arith.constant 0 : index
    %64 = vector.load %arg10[%c12, %c0_18] : memref<36x256xbf16, #tpu.memory_space<vmem>>, vector<4x256xbf16>
    tpu.vector_store %arg10[%c12, %c0_18], %63 {strides = array<i32>} : memref<36x256xbf16, #tpu.memory_space<vmem>>, vector<4x256xbf16>,
    %c16 = arith.constant 16 : index
    %c0_19 = arith.constant 0 : index
    %65 = vector.load %arg10[%c16, %c0_19] : memref<36x256xbf16, #tpu.memory_space<vmem>>, vector<4x256xbf16>
    tpu.vector_store %arg10[%c16, %c0_19], %32 {strides = array<i32>} : memref<36x256xbf16, #tpu.memory_space<vmem>>, vector<4x256xbf16>,
    %66 = vector.extract_strided_slice %32 {offsets = [0, 1], sizes = [4, 255], strides = [1, 1]} : vector<4x256xbf16> to vector<4x255xbf16>
    %67 = vector.extract_strided_slice %32 {offsets = [0, 0], sizes = [4, 1], strides = [1, 1]} : vector<4x256xbf16> to vector<4x1xbf16>
    %68 = tpu.concatenate %66, %67 in 1 : vector<4x255xbf16>, vector<4x1xbf16> -> vector<4x256xbf16>
    %cst_20 = arith.constant 0.000000e+00 : bf16
    %69 = vector.shape_cast %10 : vector<1x256xi1> to vector<1x256xi1>
    %70 = vector.broadcast %69 : vector<1x256xi1> to vector<4x256xi1>
    %71 = vector.broadcast %cst_20 : bf16 to vector<4x256xbf16>
    %72 = arith.select %70, %68, %71 : vector<4x256xi1>, vector<4x256xbf16>
    %c20 = arith.constant 20 : index
    %c0_21 = arith.constant 0 : index
    %73 = vector.load %arg10[%c20, %c0_21] : memref<36x256xbf16, #tpu.memory_space<vmem>>, vector<4x256xbf16>
    tpu.vector_store %arg10[%c20, %c0_21], %72 {strides = array<i32>} : memref<36x256xbf16, #tpu.memory_space<vmem>>, vector<4x256xbf16>,
    %74 = vector.extract_strided_slice %32 {offsets = [0, 15], sizes = [4, 241], strides = [1, 1]} : vector<4x256xbf16> to vector<4x241xbf16>
    %75 = vector.extract_strided_slice %32 {offsets = [0, 0], sizes = [4, 15], strides = [1, 1]} : vector<4x256xbf16> to vector<4x15xbf16>
    %76 = tpu.concatenate %74, %75 in 1 : vector<4x241xbf16>, vector<4x15xbf16> -> vector<4x256xbf16>
    %cst_22 = arith.constant 0.000000e+00 : bf16
    %77 = vector.shape_cast %13 : vector<1x256xi1> to vector<1x256xi1>
    %78 = vector.broadcast %77 : vector<1x256xi1> to vector<4x256xi1>
    %79 = vector.broadcast %cst_22 : bf16 to vector<4x256xbf16>
    %80 = arith.select %78, %76, %79 : vector<4x256xi1>, vector<4x256xbf16>
    %c24 = arith.constant 24 : index
    %c0_23 = arith.constant 0 : index
    %81 = vector.load %arg10[%c24, %c0_23] : memref<36x256xbf16, #tpu.memory_space<vmem>>, vector<4x256xbf16>
    tpu.vector_store %arg10[%c24, %c0_23], %80 {strides = array<i32>} : memref<36x256xbf16, #tpu.memory_space<vmem>>, vector<4x256xbf16>,
    %82 = vector.extract_strided_slice %32 {offsets = [0, 16], sizes = [4, 240], strides = [1, 1]} : vector<4x256xbf16> to vector<4x240xbf16>
    %83 = vector.extract_strided_slice %32 {offsets = [0, 0], sizes = [4, 16], strides = [1, 1]} : vector<4x256xbf16> to vector<4x16xbf16>
    %84 = tpu.concatenate %82, %83 in 1 : vector<4x240xbf16>, vector<4x16xbf16> -> vector<4x256xbf16>
    %cst_24 = arith.constant 0.000000e+00 : bf16
    %85 = vector.shape_cast %6 : vector<1x256xi1> to vector<1x256xi1>
    %86 = vector.broadcast %85 : vector<1x256xi1> to vector<4x256xi1>
    %87 = vector.broadcast %cst_24 : bf16 to vector<4x256xbf16>
    %88 = arith.select %86, %84, %87 : vector<4x256xi1>, vector<4x256xbf16>
    %c28 = arith.constant 28 : index
    %c0_25 = arith.constant 0 : index
    %89 = vector.load %arg10[%c28, %c0_25] : memref<36x256xbf16, #tpu.memory_space<vmem>>, vector<4x256xbf16>
    tpu.vector_store %arg10[%c28, %c0_25], %88 {strides = array<i32>} : memref<36x256xbf16, #tpu.memory_space<vmem>>, vector<4x256xbf16>,
    %90 = vector.extract_strided_slice %32 {offsets = [0, 17], sizes = [4, 239], strides = [1, 1]} : vector<4x256xbf16> to vector<4x239xbf16>
    %91 = vector.extract_strided_slice %32 {offsets = [0, 0], sizes = [4, 17], strides = [1, 1]} : vector<4x256xbf16> to vector<4x17xbf16>
    %92 = tpu.concatenate %90, %91 in 1 : vector<4x239xbf16>, vector<4x17xbf16> -> vector<4x256xbf16>
    %cst_26 = arith.constant 0.000000e+00 : bf16
    %93 = vector.shape_cast %14 : vector<1x256xi1> to vector<1x256xi1>
    %94 = vector.broadcast %93 : vector<1x256xi1> to vector<4x256xi1>
    %95 = vector.broadcast %cst_26 : bf16 to vector<4x256xbf16>
    %96 = arith.select %94, %92, %95 : vector<4x256xi1>, vector<4x256xbf16>
    %c32 = arith.constant 32 : index
    %c0_27 = arith.constant 0 : index
    %97 = vector.load %arg10[%c32, %c0_27] : memref<36x256xbf16, #tpu.memory_space<vmem>>, vector<4x256xbf16>
    tpu.vector_store %arg10[%c32, %c0_27], %96 {strides = array<i32>} : memref<36x256xbf16, #tpu.memory_space<vmem>>, vector<4x256xbf16>,
    %c0_28 = arith.constant 0 : index
    %c0_29 = arith.constant 0 : index
    %98 = vector.load %arg10[%c0_28, %c0_29] : memref<36x256xbf16, #tpu.memory_space<vmem>>, vector<36x256xbf16>
    %c0_30 = arith.constant 0 : index
    %c0_31 = arith.constant 0 : index
    %99 = vector.load %arg6[%c0_30, %c0_31] : memref<4x36xbf16, #tpu.memory_space<vmem>>, vector<4x36xbf16>
    %cst_32 = arith.constant dense<0.000000e+00> : vector<4x256xf32>
    %100 = tpu.matmul %99, %98, %cst_32 {dimension_numbers = #tpu.dot_dimension_numbers<[1], [0], [0], [1], [0, 0, 1, 1], [], []>} : vector<4x36xbf16>, vector<36x256xbf16>, vector<4x256xf32> -> vector<4x256xf32>
    %c0_33 = arith.constant 0 : index
    %c0_34 = arith.constant 0 : index
    %101 = vector.load %arg7[%c0_33, %c0_34] : memref<4x1xf32, #tpu.memory_space<vmem>>, vector<4x1xf32>
    %102 = vector.broadcast %101 : vector<4x1xf32> to vector<4x256xf32>
    %103 = arith.addf %100, %102 : vector<4x256xf32>
    %cst_35 = arith.constant 0.000000e+00 : f32
    %104 = vector.broadcast %cst_35 : f32 to vector<4x256xf32>
    %105 = arith.maximumf %103, %104 : vector<4x256xf32>
    %c0_36 = arith.constant 0 : index
    %c0_37 = arith.constant 0 : index
    %106 = vector.load %arg8[%c0_36, %c0_37] : memref<16x4xbf16, #tpu.memory_space<vmem>>, vector<16x4xbf16>
    %107 = arith.truncf %105 : vector<4x256xf32> to vector<4x256xbf16>
    %cst_38 = arith.constant dense<0.000000e+00> : vector<16x256xf32>
    %108 = tpu.matmul %106, %107, %cst_38 {dimension_numbers = #tpu.dot_dimension_numbers<[1], [0], [0], [1], [0, 0, 1, 1], [], []>} : vector<16x4xbf16>, vector<4x256xbf16>, vector<16x256xf32> -> vector<16x256xf32>
    %109 = arith.addf %108, %25 : vector<16x256xf32>
    %c0_39 = arith.constant 0 : index
    %c0_40 = arith.constant 0 : index
    %c0_41 = arith.constant 0 : index
    %110 = vector.load %arg9[%c0_39, %c0_40, %c0_41] : memref<2x16x256xf32, #tpu.memory_space<vmem>>, vector<1x16x256xf32>
    %111 = vector.shape_cast %110 : vector<1x16x256xf32> to vector<16x256xf32>
    %112 = vector.shape_cast %109 : vector<16x256xf32> to vector<1x16x256xf32>
    tpu.vector_store %arg9[%c0_39, %c0_40, %c0_41], %112 {strides = array<i32>} : memref<2x16x256xf32, #tpu.memory_space<vmem>>, vector<1x16x256xf32>,
    %c1 = arith.constant 1 : index
    %c0_42 = arith.constant 0 : index
    %c0_43 = arith.constant 0 : index
    %113 = vector.load %arg1[%c1, %c0_42, %c0_43] : memref<2x4x256xf32, #tpu.memory_space<vmem>>, vector<1x4x256xf32>
    %114 = vector.shape_cast %113 : vector<1x4x256xf32> to vector<4x256xf32>
    %c0_44 = arith.constant 0 : index
    %c0_45 = arith.constant 0 : index
    %115 = vector.load %arg3[%c0_44, %c0_45] : memref<4x1xf32, #tpu.memory_space<vmem>>, vector<4x1xf32>
    %116 = vector.broadcast %115 : vector<4x1xf32> to vector<4x256xf32>
    %117 = arith.addf %114, %116 : vector<4x256xf32>
    %cst_46 = arith.constant 0.000000e+00 : f32
    %118 = vector.broadcast %cst_46 : f32 to vector<4x256xf32>
    %119 = arith.maximumf %117, %118 : vector<4x256xf32>
    %c0_47 = arith.constant 0 : index
    %c0_48 = arith.constant 0 : index
    %120 = vector.load %arg4[%c0_47, %c0_48] : memref<20x4xbf16, #tpu.memory_space<vmem>>, vector<20x4xbf16>
    %121 = arith.truncf %119 : vector<4x256xf32> to vector<4x256xbf16>
    %cst_49 = arith.constant dense<0.000000e+00> : vector<20x256xf32>
    %122 = tpu.matmul %120, %121, %cst_49 {dimension_numbers = #tpu.dot_dimension_numbers<[1], [0], [0], [1], [0, 0, 1, 1], [], []>} : vector<20x4xbf16>, vector<4x256xbf16>, vector<20x256xf32> -> vector<20x256xf32>
    %123 = vector.extract_strided_slice %122 {offsets = [0, 0], sizes = [16, 256], strides = [1, 1]} : vector<20x256xf32> to vector<16x256xf32>
    %124 = vector.extract_strided_slice %122 {offsets = [16, 0], sizes = [4, 256], strides = [1, 1]} : vector<20x256xf32> to vector<4x256xf32>
    %c0_50 = arith.constant 0 : index
    %c0_51 = arith.constant 0 : index
    %125 = vector.load %arg5[%c0_50, %c0_51] : memref<4x1xf32, #tpu.memory_space<vmem>>, vector<4x1xf32>
    %126 = vector.broadcast %125 : vector<4x1xf32> to vector<4x256xf32>
    %127 = arith.addf %124, %126 : vector<4x256xf32>
    %cst_52 = arith.constant 0.000000e+00 : f32
    %128 = vector.broadcast %cst_52 : f32 to vector<4x256xf32>
    %129 = arith.maximumf %127, %128 : vector<4x256xf32>
    %130 = arith.truncf %129 : vector<4x256xf32> to vector<4x256xbf16>
    %131 = vector.extract_strided_slice %130 {offsets = [0, 239], sizes = [4, 17], strides = [1, 1]} : vector<4x256xbf16> to vector<4x17xbf16>
    %132 = vector.extract_strided_slice %130 {offsets = [0, 0], sizes = [4, 239], strides = [1, 1]} : vector<4x256xbf16> to vector<4x239xbf16>
    %133 = tpu.concatenate %131, %132 in 1 : vector<4x17xbf16>, vector<4x239xbf16> -> vector<4x256xbf16>
    %cst_53 = arith.constant 0.000000e+00 : bf16
    %134 = vector.shape_cast %11 : vector<1x256xi1> to vector<1x256xi1>
    %135 = vector.broadcast %134 : vector<1x256xi1> to vector<4x256xi1>
    %136 = vector.broadcast %cst_53 : bf16 to vector<4x256xbf16>
    %137 = arith.select %135, %133, %136 : vector<4x256xi1>, vector<4x256xbf16>
    %c0_54 = arith.constant 0 : index
    %c0_55 = arith.constant 0 : index
    %138 = vector.load %arg10[%c0_54, %c0_55] : memref<36x256xbf16, #tpu.memory_space<vmem>>, vector<4x256xbf16>
    tpu.vector_store %arg10[%c0_54, %c0_55], %137 {strides = array<i32>} : memref<36x256xbf16, #tpu.memory_space<vmem>>, vector<4x256xbf16>,
    %139 = vector.extract_strided_slice %130 {offsets = [0, 240], sizes = [4, 16], strides = [1, 1]} : vector<4x256xbf16> to vector<4x16xbf16>
    %140 = vector.extract_strided_slice %130 {offsets = [0, 0], sizes = [4, 240], strides = [1, 1]} : vector<4x256xbf16> to vector<4x240xbf16>
    %141 = tpu.concatenate %139, %140 in 1 : vector<4x16xbf16>, vector<4x240xbf16> -> vector<4x256xbf16>
    %cst_56 = arith.constant 0.000000e+00 : bf16
    %142 = vector.shape_cast %4 : vector<1x256xi1> to vector<1x256xi1>
    %143 = vector.broadcast %142 : vector<1x256xi1> to vector<4x256xi1>
    %144 = vector.broadcast %cst_56 : bf16 to vector<4x256xbf16>
    %145 = arith.select %143, %141, %144 : vector<4x256xi1>, vector<4x256xbf16>
    %c4_57 = arith.constant 4 : index
    %c0_58 = arith.constant 0 : index
    %146 = vector.load %arg10[%c4_57, %c0_58] : memref<36x256xbf16, #tpu.memory_space<vmem>>, vector<4x256xbf16>
    tpu.vector_store %arg10[%c4_57, %c0_58], %145 {strides = array<i32>} : memref<36x256xbf16, #tpu.memory_space<vmem>>, vector<4x256xbf16>,
    %147 = vector.extract_strided_slice %130 {offsets = [0, 241], sizes = [4, 15], strides = [1, 1]} : vector<4x256xbf16> to vector<4x15xbf16>
    %148 = vector.extract_strided_slice %130 {offsets = [0, 0], sizes = [4, 241], strides = [1, 1]} : vector<4x256xbf16> to vector<4x241xbf16>
    %149 = tpu.concatenate %147, %148 in 1 : vector<4x15xbf16>, vector<4x241xbf16> -> vector<4x256xbf16>
    %cst_59 = arith.constant 0.000000e+00 : bf16
    %150 = vector.shape_cast %12 : vector<1x256xi1> to vector<1x256xi1>
    %151 = vector.broadcast %150 : vector<1x256xi1> to vector<4x256xi1>
    %152 = vector.broadcast %cst_59 : bf16 to vector<4x256xbf16>
    %153 = arith.select %151, %149, %152 : vector<4x256xi1>, vector<4x256xbf16>
    %c8_60 = arith.constant 8 : index
    %c0_61 = arith.constant 0 : index
    %154 = vector.load %arg10[%c8_60, %c0_61] : memref<36x256xbf16, #tpu.memory_space<vmem>>, vector<4x256xbf16>
    tpu.vector_store %arg10[%c8_60, %c0_61], %153 {strides = array<i32>} : memref<36x256xbf16, #tpu.memory_space<vmem>>, vector<4x256xbf16>,
    %155 = vector.extract_strided_slice %130 {offsets = [0, 255], sizes = [4, 1], strides = [1, 1]} : vector<4x256xbf16> to vector<4x1xbf16>
    %156 = vector.extract_strided_slice %130 {offsets = [0, 0], sizes = [4, 255], strides = [1, 1]} : vector<4x256xbf16> to vector<4x255xbf16>
    %157 = tpu.concatenate %155, %156 in 1 : vector<4x1xbf16>, vector<4x255xbf16> -> vector<4x256xbf16>
    %cst_62 = arith.constant 0.000000e+00 : bf16
    %158 = vector.shape_cast %8 : vector<1x256xi1> to vector<1x256xi1>
    %159 = vector.broadcast %158 : vector<1x256xi1> to vector<4x256xi1>
    %160 = vector.broadcast %cst_62 : bf16 to vector<4x256xbf16>
    %161 = arith.select %159, %157, %160 : vector<4x256xi1>, vector<4x256xbf16>
    %c12_63 = arith.constant 12 : index
    %c0_64 = arith.constant 0 : index
    %162 = vector.load %arg10[%c12_63, %c0_64] : memref<36x256xbf16, #tpu.memory_space<vmem>>, vector<4x256xbf16>
    tpu.vector_store %arg10[%c12_63, %c0_64], %161 {strides = array<i32>} : memref<36x256xbf16, #tpu.memory_space<vmem>>, vector<4x256xbf16>,
    %c16_65 = arith.constant 16 : index
    %c0_66 = arith.constant 0 : index
    %163 = vector.load %arg10[%c16_65, %c0_66] : memref<36x256xbf16, #tpu.memory_space<vmem>>, vector<4x256xbf16>
    tpu.vector_store %arg10[%c16_65, %c0_66], %130 {strides = array<i32>} : memref<36x256xbf16, #tpu.memory_space<vmem>>, vector<4x256xbf16>,
    %164 = vector.extract_strided_slice %130 {offsets = [0, 1], sizes = [4, 255], strides = [1, 1]} : vector<4x256xbf16> to vector<4x255xbf16>
    %165 = vector.extract_strided_slice %130 {offsets = [0, 0], sizes = [4, 1], strides = [1, 1]} : vector<4x256xbf16> to vector<4x1xbf16>
    %166 = tpu.concatenate %164, %165 in 1 : vector<4x255xbf16>, vector<4x1xbf16> -> vector<4x256xbf16>
    %cst_67 = arith.constant 0.000000e+00 : bf16
    %167 = vector.shape_cast %10 : vector<1x256xi1> to vector<1x256xi1>
    %168 = vector.broadcast %167 : vector<1x256xi1> to vector<4x256xi1>
    %169 = vector.broadcast %cst_67 : bf16 to vector<4x256xbf16>
    %170 = arith.select %168, %166, %169 : vector<4x256xi1>, vector<4x256xbf16>
    %c20_68 = arith.constant 20 : index
    %c0_69 = arith.constant 0 : index
    %171 = vector.load %arg10[%c20_68, %c0_69] : memref<36x256xbf16, #tpu.memory_space<vmem>>, vector<4x256xbf16>
    tpu.vector_store %arg10[%c20_68, %c0_69], %170 {strides = array<i32>} : memref<36x256xbf16, #tpu.memory_space<vmem>>, vector<4x256xbf16>,
    %172 = vector.extract_strided_slice %130 {offsets = [0, 15], sizes = [4, 241], strides = [1, 1]} : vector<4x256xbf16> to vector<4x241xbf16>
    %173 = vector.extract_strided_slice %130 {offsets = [0, 0], sizes = [4, 15], strides = [1, 1]} : vector<4x256xbf16> to vector<4x15xbf16>
    %174 = tpu.concatenate %172, %173 in 1 : vector<4x241xbf16>, vector<4x15xbf16> -> vector<4x256xbf16>
    %cst_70 = arith.constant 0.000000e+00 : bf16
    %175 = vector.shape_cast %13 : vector<1x256xi1> to vector<1x256xi1>
    %176 = vector.broadcast %175 : vector<1x256xi1> to vector<4x256xi1>
    %177 = vector.broadcast %cst_70 : bf16 to vector<4x256xbf16>
    %178 = arith.select %176, %174, %177 : vector<4x256xi1>, vector<4x256xbf16>
    %c24_71 = arith.constant 24 : index
    %c0_72 = arith.constant 0 : index
    %179 = vector.load %arg10[%c24_71, %c0_72] : memref<36x256xbf16, #tpu.memory_space<vmem>>, vector<4x256xbf16>
    tpu.vector_store %arg10[%c24_71, %c0_72], %178 {strides = array<i32>} : memref<36x256xbf16, #tpu.memory_space<vmem>>, vector<4x256xbf16>,
    %180 = vector.extract_strided_slice %130 {offsets = [0, 16], sizes = [4, 240], strides = [1, 1]} : vector<4x256xbf16> to vector<4x240xbf16>
    %181 = vector.extract_strided_slice %130 {offsets = [0, 0], sizes = [4, 16], strides = [1, 1]} : vector<4x256xbf16> to vector<4x16xbf16>
    %182 = tpu.concatenate %180, %181 in 1 : vector<4x240xbf16>, vector<4x16xbf16> -> vector<4x256xbf16>
    %cst_73 = arith.constant 0.000000e+00 : bf16
    %183 = vector.shape_cast %6 : vector<1x256xi1> to vector<1x256xi1>
    %184 = vector.broadcast %183 : vector<1x256xi1> to vector<4x256xi1>
    %185 = vector.broadcast %cst_73 : bf16 to vector<4x256xbf16>
    %186 = arith.select %184, %182, %185 : vector<4x256xi1>, vector<4x256xbf16>
    %c28_74 = arith.constant 28 : index
    %c0_75 = arith.constant 0 : index
    %187 = vector.load %arg10[%c28_74, %c0_75] : memref<36x256xbf16, #tpu.memory_space<vmem>>, vector<4x256xbf16>
    tpu.vector_store %arg10[%c28_74, %c0_75], %186 {strides = array<i32>} : memref<36x256xbf16, #tpu.memory_space<vmem>>, vector<4x256xbf16>,
    %188 = vector.extract_strided_slice %130 {offsets = [0, 17], sizes = [4, 239], strides = [1, 1]} : vector<4x256xbf16> to vector<4x239xbf16>
    %189 = vector.extract_strided_slice %130 {offsets = [0, 0], sizes = [4, 17], strides = [1, 1]} : vector<4x256xbf16> to vector<4x17xbf16>
    %190 = tpu.concatenate %188, %189 in 1 : vector<4x239xbf16>, vector<4x17xbf16> -> vector<4x256xbf16>
    %cst_76 = arith.constant 0.000000e+00 : bf16
    %191 = vector.shape_cast %14 : vector<1x256xi1> to vector<1x256xi1>
    %192 = vector.broadcast %191 : vector<1x256xi1> to vector<4x256xi1>
    %193 = vector.broadcast %cst_76 : bf16 to vector<4x256xbf16>
    %194 = arith.select %192, %190, %193 : vector<4x256xi1>, vector<4x256xbf16>
    %c32_77 = arith.constant 32 : index
    %c0_78 = arith.constant 0 : index
    %195 = vector.load %arg10[%c32_77, %c0_78] : memref<36x256xbf16, #tpu.memory_space<vmem>>, vector<4x256xbf16>
    tpu.vector_store %arg10[%c32_77, %c0_78], %194 {strides = array<i32>} : memref<36x256xbf16, #tpu.memory_space<vmem>>, vector<4x256xbf16>,
    %c0_79 = arith.constant 0 : index
    %c0_80 = arith.constant 0 : index
    %196 = vector.load %arg10[%c0_79, %c0_80] : memref<36x256xbf16, #tpu.memory_space<vmem>>, vector<36x256xbf16>
    %c0_81 = arith.constant 0 : index
    %c0_82 = arith.constant 0 : index
    %197 = vector.load %arg6[%c0_81, %c0_82] : memref<4x36xbf16, #tpu.memory_space<vmem>>, vector<4x36xbf16>
    %cst_83 = arith.constant dense<0.000000e+00> : vector<4x256xf32>
    %198 = tpu.matmul %197, %196, %cst_83 {dimension_numbers = #tpu.dot_dimension_numbers<[1], [0], [0], [1], [0, 0, 1, 1], [], []>} : vector<4x36xbf16>, vector<36x256xbf16>, vector<4x256xf32> -> vector<4x256xf32>
    %c0_84 = arith.constant 0 : index
    %c0_85 = arith.constant 0 : index
    %199 = vector.load %arg7[%c0_84, %c0_85] : memref<4x1xf32, #tpu.memory_space<vmem>>, vector<4x1xf32>
    %200 = vector.broadcast %199 : vector<4x1xf32> to vector<4x256xf32>
    %201 = arith.addf %198, %200 : vector<4x256xf32>
    %cst_86 = arith.constant 0.000000e+00 : f32
    %202 = vector.broadcast %cst_86 : f32 to vector<4x256xf32>
    %203 = arith.maximumf %201, %202 : vector<4x256xf32>
    %c0_87 = arith.constant 0 : index
    %c0_88 = arith.constant 0 : index
    %204 = vector.load %arg8[%c0_87, %c0_88] : memref<16x4xbf16, #tpu.memory_space<vmem>>, vector<16x4xbf16>
    %205 = arith.truncf %203 : vector<4x256xf32> to vector<4x256xbf16>
    %cst_89 = arith.constant dense<0.000000e+00> : vector<16x256xf32>
    %206 = tpu.matmul %204, %205, %cst_89 {dimension_numbers = #tpu.dot_dimension_numbers<[1], [0], [0], [1], [0, 0, 1, 1], [], []>} : vector<16x4xbf16>, vector<4x256xbf16>, vector<16x256xf32> -> vector<16x256xf32>
    %207 = arith.addf %206, %123 : vector<16x256xf32>
    %c1_90 = arith.constant 1 : index
    %c0_91 = arith.constant 0 : index
    %c0_92 = arith.constant 0 : index
    %208 = vector.load %arg9[%c1_90, %c0_91, %c0_92] : memref<2x16x256xf32, #tpu.memory_space<vmem>>, vector<1x16x256xf32>
    %209 = vector.shape_cast %208 : vector<1x16x256xf32> to vector<16x256xf32>
    %210 = vector.shape_cast %207 : vector<16x256xf32> to vector<1x16x256xf32>
    tpu.vector_store %arg9[%c1_90, %c0_91, %c0_92], %210 {strides = array<i32>} : memref<2x16x256xf32, #tpu.memory_space<vmem>>, vector<1x16x256xf32>,
    return
  }
  func.func @transform_0(%arg0: i32) -> (i32, i32, i32) {
    %c0_i32 = arith.constant 0 : i32
    %c0_i32_0 = arith.constant 0 : i32
    %c0_i32_1 = arith.constant 0 : i32
    return %arg0, %c0_i32, %c0_i32_0 : i32, i32, i32
  }
  func.func @transform_1(%arg0: i32) -> (i32, i32) {
    %c0_i32 = arith.constant 0 : i32
    %c0_i32_0 = arith.constant 0 : i32
    %c0_i32_1 = arith.constant 0 : i32
    return %c0_i32, %c0_i32_0 : i32, i32
  }
  func.func @transform_2(%arg0: i32) -> (i32, i32) {
    %c0_i32 = arith.constant 0 : i32
    %c0_i32_0 = arith.constant 0 : i32
    %c0_i32_1 = arith.constant 0 : i32
    return %c0_i32, %c0_i32_0 : i32, i32
  }
  func.func @transform_3(%arg0: i32) -> (i32, i32) {
    %c0_i32 = arith.constant 0 : i32
    %c0_i32_0 = arith.constant 0 : i32
    %c0_i32_1 = arith.constant 0 : i32
    return %c0_i32, %c0_i32_0 : i32, i32
  }
  func.func @transform_4(%arg0: i32) -> (i32, i32) {
    %c0_i32 = arith.constant 0 : i32
    %c0_i32_0 = arith.constant 0 : i32
    %c0_i32_1 = arith.constant 0 : i32
    return %c0_i32, %c0_i32_0 : i32, i32
  }
  func.func @transform_5(%arg0: i32) -> (i32, i32) {
    %c0_i32 = arith.constant 0 : i32
    %c0_i32_0 = arith.constant 0 : i32
    %c0_i32_1 = arith.constant 0 : i32
    return %c0_i32, %c0_i32_0 : i32, i32
  }
  func.func @transform_6(%arg0: i32) -> (i32, i32) {
    %c0_i32 = arith.constant 0 : i32
    %c0_i32_0 = arith.constant 0 : i32
    %c0_i32_1 = arith.constant 0 : i32
    return %c0_i32, %c0_i32_0 : i32, i32
  }
  func.func @transform_7(%arg0: i32) -> (i32, i32) {
    %c0_i32 = arith.constant 0 : i32
    %c0_i32_0 = arith.constant 0 : i32
    %c0_i32_1 = arith.constant 0 : i32
    return %c0_i32, %c0_i32_0 : i32, i32
  }
  func.func @transform_8(%arg0: i32) -> (i32, i32, i32) {
    %c0_i32 = arith.constant 0 : i32
    %c0_i32_0 = arith.constant 0 : i32
    %c0_i32_1 = arith.constant 0 : i32
    return %arg0, %c0_i32, %c0_i32_0 : i32, i32, i32
  }
}

</mosaic_0001>

<llo_original>
// kernel: _forward.1
$region0: #{_forward.1}
  #allocation0 [shape = 'u32[]', space=smem, size = 0x4, offset = 0x4, fixed_abs, tag = 'smem constant byte address 0x4 - core index']
  #allocation1 [shape = 'u32[144,128]{1,0:T(1,128)}', space=vmem, size = 0x12000, scoped, tag = 'internal scratch']
  #allocation2 [shape = 'bf16[36,256]{1,0:T(8,128)(2,1)}', space=vmem, size = 0x5000, scoped, tag = 'scratch operand']
  %s0 = inlined_call_operand.vmem [shape: f32[2,4,256], index: 0, kind: input, shape index: {}]
  %s1 = inlined_call_operand.vmem [shape: f32[4,1], index: 1, kind: input, shape index: {}]
  %s2 = inlined_call_operand.vmem [shape: f32[4,1], index: 2, kind: input, shape index: {}]
  %s3 = inlined_call_operand.vmem [shape: bf16[20,4], index: 3, kind: input, shape index: {}]
  %s4 = inlined_call_operand.vmem [shape: f32[4,1], index: 4, kind: input, shape index: {}]
  %s5 = inlined_call_operand.vmem [shape: bf16[4,36], index: 5, kind: input, shape index: {}]
  %s6 = inlined_call_operand.vmem [shape: f32[4,1], index: 6, kind: input, shape index: {}]
  %s7 = inlined_call_operand.vmem [shape: bf16[16,4], index: 7, kind: input, shape index: {}]
  %s8 = inlined_call_operand.vmem [shape: f32[2,16,256], index: 8, kind: output, shape index: {}]
  %s9 = sld [smem:[#allocation0]]
  $region42: #{_forward.1} parent=0
    _
  %s11 = ssub.s32 1, %s9
  %s12 = scalar_select 0, %s11, %s9
  // Predicated region
  $region2: #{_forward.1} parent=0 // pred_check
    _
  $region3: #{_forward.1} parent=0 // pred_check_branch
    %14 = sbr.rel (0) target = $region5
  $region4: #{_forward.1} parent=0 // pred_region
    _
  $region5: #{_forward.1} parent=0 // pred_fallthru
    _
  // Predicated region
  $region6: #{_forward.1} parent=0 // pred_check
    _
  $region7: #{_forward.1} parent=0 // pred_check_branch
    %16 = sbr.rel (0) target = $region9
  $region8: #{_forward.1} parent=0 // pred_region
    _
  $region9: #{_forward.1} parent=0 // pred_fallthru
    _
  // Predicated region
  $region10: #{_forward.1} parent=0 // pred_check
    _
  $region11: #{_forward.1} parent=0 // pred_check_branch
    %18 = sbr.rel (0) target = $region13
  $region12: #{_forward.1} parent=0 // pred_region
    _
  $region13: #{_forward.1} parent=0 // pred_fallthru
    _
  // Predicated region
  $region14: #{_forward.1} parent=0 // pred_check
    _
  $region15: #{_forward.1} parent=0 // pred_check_branch
    %20 = sbr.rel (0) target = $region17
  $region16: #{_forward.1} parent=0 // pred_region
    _
  $region17: #{_forward.1} parent=0 // pred_fallthru
    _
  // Predicated region
  $region18: #{_forward.1} parent=0 // pred_check
    _
  $region19: #{_forward.1} parent=0 // pred_check_branch
    %22 = sbr.rel (0) target = $region21
  $region20: #{_forward.1} parent=0 // pred_region
    _
  $region21: #{_forward.1} parent=0 // pred_fallthru
    _
  // Predicated region
  $region22: #{_forward.1} parent=0 // pred_check
    _
  $region23: #{_forward.1} parent=0 // pred_check_branch
    %24 = sbr.rel (0) target = $region25
  $region24: #{_forward.1} parent=0 // pred_region
    _
  $region25: #{_forward.1} parent=0 // pred_fallthru
    _
  // Predicated region
  $region26: #{_forward.1} parent=0 // pred_check
    _
  $region27: #{_forward.1} parent=0 // pred_check_branch
    %26 = sbr.rel (0) target = $region29
  $region28: #{_forward.1} parent=0 // pred_region
    _
  $region29: #{_forward.1} parent=0 // pred_fallthru
    _
  // Predicated region
  $region30: #{_forward.1} parent=0 // pred_check
    _
  $region31: #{_forward.1} parent=0 // pred_check_branch
    %28 = sbr.rel (0) target = $region33
  $region32: #{_forward.1} parent=0 // pred_region
    _
  $region33: #{_forward.1} parent=0 // pred_fallthru
    _
  %v32 = vlaneseq
  %v33 = vand.u32 %v32, 127
  %v34 = vadd.s32 %v33, 128
  %v35 = vand.u32 %v33, 15
  %v36 = vand.u32 %v34, 15
  %vm37 = vcmp.ge.s32.totalorder %v33, 16
  %vm38 = vcmp.ge.s32.totalorder %v34, 16
  %vm39 = vcmp.lt.s32.totalorder %v33, 240
  %vm40 = vcmp.lt.s32.totalorder %v34, 240
  %vm41 = vcmp.ge.s32.totalorder %v35, 1
  %vm42 = vcmp.ge.s32.totalorder %v36, 1
  %vm43 = vcmp.le.s32.totalorder %v35, 14
  %vm44 = vcmp.le.s32.totalorder %v36, 14
  %vm45 = vmand %vm37, %vm41
  %vm46 = vmand %vm38, %vm42
  %vm47 = vmand %vm37, %vm43
  %vm48 = vmand %vm38, %vm44
  %vm49 = vmand %vm39, %vm41
  %vm50 = vmand %vm40, %vm42
  %vm51 = vmand %vm39, %vm43
  %vm52 = vmand %vm40, %vm44
  %v53 = vld [vmem:[%s0] sm:$0xff]
  %v54 = vld [vmem:[%s2] sm:$0xf]
  %56 = vset.pattern.permute.xlu0 0
  %57 = vperm.xlu0 %56, %v54
  %v58 = vpop.permute.xlu0 %57
  %v60 = vunpack.c.l.s4 839922192
  %v61 = vunpack.c.0.s8 %v60
  %v62 = vlaneseq
  %v63 = vshrl.u32 %v62, 7
  %v64 = vsub.s32 %v61, %v63
  %v65 = vrot.slane %v58, %v64
  %v67 = vadd.f32 %v53, %v65
  %v68 = vmax.f32 %v67, 0.0
  %v69 = vld [vmem:[%s3] sm:$0xf]
  %v70 = vld [vmem:[%s3 + $0x4] sm:$0xf]
  %v71 = vld [vmem:[%s3 + $0x8] sm:$0x3]
  %v73 = vcombine.high %v68, %v68
  %v75 = vpack.c.bf16 %v68, %v68
  %v76 = vpack.c.bf16 %v73, %v73
  %v80 = vunpack.c.l.b16 %v69
  %v81 = vunpack.c.l.b16 %v70
  %v82 = vunpack.c.l.b16 %v71
  %v83 = vpack.c.b16 %v81, %v80
  %v84 = vpack.c.b16 %v82, %v82
  %vm85 = vcmask 31744
  %v87 = vsel %vm85, %v83, 0
  %v90 = vsel %vm85, %v84, 0
  %vm92 = vcmask 1041408
  %v94 = vsel %vm92, %v75, 0
  %v97 = vsel %vm92, %v76, 0
  %99 = vmatprep.subr.bf16.mxu0 0
  %100 = vmatpush1.bf16.msra.mxu0 0
  %101 = vmatprep.subr.bf16.mxu0 0
  %102 = vmatpush1.bf16.msra.mxu0 0
  %103 = vmatprep.subr.bf16.mxu0 0
  %104 = vmatpush1.bf16.msra.mxu0 0
  %105 = vmatprep.subr.bf16.mxu0 0
  %106 = vmatpush1.bf16.msra.mxu0 0
  %107 = vmatprep.subr.bf16.mxu0 0
  %108 = vmatpush1.bf16.msra.mxu0 0
  %109 = vmatprep.subr.bf16.mxu0 0
  %110 = vmatpush1.bf16.msra.mxu0 0
  %111 = vmatprep.subr.bf16.mxu0 0
  %112 = vmatpush1.bf16.msra.mxu0 0
  %113 = vmatprep.subr.bf16.mxu0 %v97
  %114 = vmatpush1.bf16.msra.mxu0 %v94
  %115 = vmatprep.subr.bf16.mxu0 0
  %116 = vmatpush2.bf16.msra.mxu0 0
  %117 = vmatprep.subr.bf16.mxu0 0
  %118 = vmatpush2.bf16.msra.mxu0 0
  %119 = vmatprep.subr.bf16.mxu0 0
  %120 = vmatpush2.bf16.msra.mxu0 0
  %121 = vmatprep.subr.bf16.mxu0 0
  %122 = vmatpush2.bf16.msra.mxu0 0
  %123 = vmatprep.subr.bf16.mxu0 0
  %124 = vmatpush2.bf16.msra.mxu0 0
  %125 = vmatprep.subr.bf16.mxu0 0
  %126 = vmatpush2.bf16.msra.mxu0 0
  %127 = vmatprep.subr.bf16.mxu0 0
  %128 = vmatpush2.bf16.msra.mxu0 0
  %129 = vmatprep.subr.bf16.mxu0 0
  %130 = vmatpush2.bf16.msra.mxu0 0
  %131 = vmatprep.mubr.bf16.mxu0 0
  %132 = vmatmul.mubr.bf16.gmra.mxu0 %v87
  %v133 = vpop.f32.mrf.mxu0
  %v134 = vadd.f32 0.0, %v133
  %v135 = vpop.f32.mrf.mxu0
  %v136 = vadd.f32 0.0, %v135
  %v137 = vpop.f32.mrf.mxu0
  %v138 = vadd.f32 0.0, %v137
  %v139 = vpop.f32.mrf.mxu0
  %v140 = vadd.f32 0.0, %v139
  %141 = vmatprep.mubr.bf16.mxu0 0
  %142 = vmatmul.mubr.bf16.gmra.mxu0 %v90
  %v143 = vpop.f32.mrf.mxu0
  %v144 = vadd.f32 0.0, %v143
  %v145 = vpop.f32.mrf.mxu0
  %v146 = vadd.f32 0.0, %v145
  %v147 = vpop.f32.mrf.mxu0
  %v148 = vpop.f32.mrf.mxu0
  %149 = vdwg.mxu0
  %v150 = vld [vmem:[%s4] sm:$0xf]
  %152 = vset.pattern.permute.xlu0 0
  %153 = vperm.xlu0 %152, %v150
  %v154 = vpop.permute.xlu0 %153
  %v156 = vadd.f32 %v144, %v154
  %v157 = vadd.f32 %v146, %v154
  %v158 = vmax.f32 %v156, 0.0
  %v159 = vmax.f32 %v157, 0.0
  %v160 = vpack.c.bf16 %v158, %v158
  %v161 = vpack.c.bf16 %v159, %v159
  %163 = vrot.lane.b32.xlu0 %v161, 17
  %v164 = vpop.permute.xlu0 %163
  %166 = vrot.lane.b32.xlu0 %v160, 17
  %v167 = vpop.permute.xlu0 %166
  %vm168 = vcmask 138240
  %v169 = vsel %vm168, %v167, %v164
  %vm171 = vcmask 138240
  %v174 = vsel %vm171, %v164, %v167
  %v176 = vsel %vm45, 1, 0
  %v177 = vsel %vm46, 1, 0
  %vm178 = vcmp.eq.s32.totalorder %v176, 1
  %vm179 = vcmp.eq.s32.totalorder %v177, 1
  %vm180 = vmpackc.low %vm179, %vm178
  %v181 = vsel %vm180, 65537, 0
  %v182 = vlaneseq
  %v183 = vshrl.u32 %v182, 7
  %v184 = vsub.s32 0, %v183
  %v185 = vrot.slane %v181, %v184
  %v186 = vlaneseq
  %v187 = vshrl.u32 %v186, 7
  %v188 = vsub.s32 4, %v187
  %v189 = vrot.slane %v181, %v188
  %vm190 = vcmp.ne.s16.totalorder %v185, 0
  %vm191 = vcmp.ne.s16.totalorder %v189, 0
  %v192 = vsel %vm190, %v174, 0
  %v193 = vsel %vm191, %v169, 0
  %v196 = vunpack.c.l.b16 %v192
  %v197 = vunpack.c.l.b16 %v193
  %v198 = vpack.c.b16 %v197, %v196
  %200 = vst [vmem:[#allocation2] sm:$0x33] %v198
  %201 = vrot.lane.b32.xlu0 %v161, 16
  %v202 = vpop.permute.xlu0 %201
  %203 = vrot.lane.b32.xlu0 %v160, 16
  %v204 = vpop.permute.xlu0 %203
  %vm205 = vcmask 130048
  %v206 = vsel %vm205, %v204, %v202
  %vm208 = vcmask 130048
  %v211 = vsel %vm208, %v202, %v204
  %v213 = vsel %vm37, 1, 0
  %v214 = vsel %vm38, 1, 0
  %vm215 = vcmp.eq.s32.totalorder %v213, 1
  %vm216 = vcmp.eq.s32.totalorder %v214, 1
  %vm217 = vmpackc.low %vm216, %vm215
  %v218 = vsel %vm217, 65537, 0
  %v219 = vlaneseq
  %v220 = vshrl.u32 %v219, 7
  %v221 = vsub.s32 0, %v220
  %v222 = vrot.slane %v218, %v221
  %v223 = vlaneseq
  %v224 = vshrl.u32 %v223, 7
  %v225 = vsub.s32 4, %v224
  %v226 = vrot.slane %v218, %v225
  %vm227 = vcmp.ne.s16.totalorder %v222, 0
  %vm228 = vcmp.ne.s16.totalorder %v226, 0
  %v229 = vsel %vm227, %v211, 0
  %v230 = vsel %vm228, %v206, 0
  %v233 = vunpack.c.l.b16 %v229
  %v234 = vunpack.c.l.b16 %v230
  %v235 = vpack.c.b16 %v234, %v233
  %v236 = vrot.slane %v235, 6
  %238 = vst [vmem:[#allocation2] sm:$0xcc] %v236
  %239 = vrot.lane.b32.xlu0 %v161, 15
  %v240 = vpop.permute.xlu0 %239
  %241 = vrot.lane.b32.xlu0 %v160, 15
  %v242 = vpop.permute.xlu0 %241
  %vm243 = vcmask 121856
  %v244 = vsel %vm243, %v242, %v240
  %vm246 = vcmask 121856
  %v249 = vsel %vm246, %v240, %v242
  %v251 = vsel %vm47, 1, 0
  %v252 = vsel %vm48, 1, 0
  %vm253 = vcmp.eq.s32.totalorder %v251, 1
  %vm254 = vcmp.eq.s32.totalorder %v252, 1
  %vm255 = vmpackc.low %vm254, %vm253
  %v256 = vsel %vm255, 65537, 0
  %v257 = vlaneseq
  %v258 = vshrl.u32 %v257, 7
  %v259 = vsub.s32 0, %v258
  %v260 = vrot.slane %v256, %v259
  %v261 = vlaneseq
  %v262 = vshrl.u32 %v261, 7
  %v263 = vsub.s32 4, %v262
  %v264 = vrot.slane %v256, %v263
  %vm265 = vcmp.ne.s16.totalorder %v260, 0
  %vm266 = vcmp.ne.s16.totalorder %v264, 0
  %v267 = vsel %vm265, %v249, 0
  %v268 = vsel %vm266, %v244, 0
  %v271 = vunpack.c.l.b16 %v267
  %v272 = vunpack.c.l.b16 %v268
  %v273 = vpack.c.b16 %v272, %v271
  %275 = vst [vmem:[#allocation2 + $0x8] sm:$0x33] %v273
  %276 = vrot.lane.b32.xlu0 %v161, 1
  %v277 = vpop.permute.xlu0 %276
  %278 = vrot.lane.b32.xlu0 %v160, 1
  %v279 = vpop.permute.xlu0 %278
  %vm280 = vcmask 7168
  %v281 = vsel %vm280, %v279, %v277
  %vm283 = vcmask 7168
  %v286 = vsel %vm283, %v277, %v279
  %v288 = vsel %vm41, 1, 0
  %v289 = vsel %vm42, 1, 0
  %vm290 = vcmp.eq.s32.totalorder %v288, 1
  %vm291 = vcmp.eq.s32.totalorder %v289, 1
  %vm292 = vmpackc.low %vm291, %vm290
  %v293 = vsel %vm292, 65537, 0
  %v294 = vlaneseq
  %v295 = vshrl.u32 %v294, 7
  %v296 = vsub.s32 0, %v295
  %v297 = vrot.slane %v293, %v296
  %v298 = vlaneseq
  %v299 = vshrl.u32 %v298, 7
  %v300 = vsub.s32 4, %v299
  %v301 = vrot.slane %v293, %v300
  %vm302 = vcmp.ne.s16.totalorder %v297, 0
  %vm303 = vcmp.ne.s16.totalorder %v301, 0
  %v304 = vsel %vm302, %v286, 0
  %v305 = vsel %vm303, %v281, 0
  %v308 = vunpack.c.l.b16 %v304
  %v309 = vunpack.c.l.b16 %v305
  %v310 = vpack.c.b16 %v309, %v308
  %v311 = vrot.slane %v310, 6
  %313 = vst [vmem:[#allocation2 + $0x8] sm:$0xcc] %v311
  %v314 = vunpack.c.l.b16 %v160
  %v315 = vunpack.c.l.b16 %v161
  %v316 = vpack.c.b16 %v315, %v314
  %318 = vst [vmem:[#allocation2 + $0x10] sm:$0x33] %v316
  %319 = vrot.lane.b32.xlu0 %v160, 127
  %v320 = vpop.permute.xlu0 %319
  %321 = vrot.lane.b32.xlu0 %v161, 127
  %v322 = vpop.permute.xlu0 %321
  %vm323 = vcmask 1039360
  %v324 = vsel %vm323, %v320, %v322
  %vm326 = vcmask 1039360
  %v329 = vsel %vm326, %v322, %v320
  %v331 = vsel %vm43, 1, 0
  %v332 = vsel %vm44, 1, 0
  %vm333 = vcmp.eq.s32.totalorder %v331, 1
  %vm334 = vcmp.eq.s32.totalorder %v332, 1
  %vm335 = vmpackc.low %vm334, %vm333
  %v336 = vsel %vm335, 65537, 0
  %v337 = vlaneseq
  %v338 = vshrl.u32 %v337, 7
  %v339 = vsub.s32 0, %v338
  %v340 = vrot.slane %v336, %v339
  %v341 = vlaneseq
  %v342 = vshrl.u32 %v341, 7
  %v343 = vsub.s32 4, %v342
  %v344 = vrot.slane %v336, %v343
  %vm345 = vcmp.ne.s16.totalorder %v340, 0
  %vm346 = vcmp.ne.s16.totalorder %v344, 0
  %v347 = vsel %vm345, %v324, 0
  %v348 = vsel %vm346, %v329, 0
  %v351 = vunpack.c.l.b16 %v347
  %v352 = vunpack.c.l.b16 %v348
  %v353 = vpack.c.b16 %v352, %v351
  %v354 = vrot.slane %v353, 6
  %356 = vst [vmem:[#allocation2 + $0x10] sm:$0xcc] %v354
  %357 = vrot.lane.b32.xlu0 %v160, 113
  %v358 = vpop.permute.xlu0 %357
  %359 = vrot.lane.b32.xlu0 %v161, 113
  %v360 = vpop.permute.xlu0 %359
  %vm361 = vcmask 924672
  %v362 = vsel %vm361, %v358, %v360
  %vm364 = vcmask 924672
  %v367 = vsel %vm364, %v360, %v358
  %v369 = vsel %vm49, 1, 0
  %v370 = vsel %vm50, 1, 0
  %vm371 = vcmp.eq.s32.totalorder %v369, 1
  %vm372 = vcmp.eq.s32.totalorder %v370, 1
  %vm373 = vmpackc.low %vm372, %vm371
  %v374 = vsel %vm373, 65537, 0
  %v375 = vlaneseq
  %v376 = vshrl.u32 %v375, 7
  %v377 = vsub.s32 0, %v376
  %v378 = vrot.slane %v374, %v377
  %v379 = vlaneseq
  %v380 = vshrl.u32 %v379, 7
  %v381 = vsub.s32 4, %v380
  %v382 = vrot.slane %v374, %v381
  %vm383 = vcmp.ne.s16.totalorder %v378, 0
  %vm384 = vcmp.ne.s16.totalorder %v382, 0
  %v385 = vsel %vm383, %v362, 0
  %v386 = vsel %vm384, %v367, 0
  %v389 = vunpack.c.l.b16 %v385
  %v390 = vunpack.c.l.b16 %v386
  %v391 = vpack.c.b16 %v390, %v389
  %393 = vst [vmem:[#allocation2 + $0x18] sm:$0x33] %v391
  %394 = vrot.lane.b32.xlu0 %v160, 112
  %v395 = vpop.permute.xlu0 %394
  %396 = vrot.lane.b32.xlu0 %v161, 112
  %v397 = vpop.permute.xlu0 %396
  %vm398 = vcmask 916480
  %v399 = vsel %vm398, %v395, %v397
  %vm401 = vcmask 916480
  %v404 = vsel %vm401, %v397, %v395
  %v406 = vsel %vm39, 1, 0
  %v407 = vsel %vm40, 1, 0
  %vm408 = vcmp.eq.s32.totalorder %v406, 1
  %vm409 = vcmp.eq.s32.totalorder %v407, 1
  %vm410 = vmpackc.low %vm409, %vm408
  %v411 = vsel %vm410, 65537, 0
  %v412 = vlaneseq
  %v413 = vshrl.u32 %v412, 7
  %v414 = vsub.s32 0, %v413
  %v415 = vrot.slane %v411, %v414
  %v416 = vlaneseq
  %v417 = vshrl.u32 %v416, 7
  %v418 = vsub.s32 4, %v417
  %v419 = vrot.slane %v411, %v418
  %vm420 = vcmp.ne.s16.totalorder %v415, 0
  %vm421 = vcmp.ne.s16.totalorder %v419, 0
  %v422 = vsel %vm420, %v399, 0
  %v423 = vsel %vm421, %v404, 0
  %v426 = vunpack.c.l.b16 %v422
  %v427 = vunpack.c.l.b16 %v423
  %v428 = vpack.c.b16 %v427, %v426
  %v429 = vrot.slane %v428, 6
  %431 = vst [vmem:[#allocation2 + $0x18] sm:$0xcc] %v429
  %432 = vrot.lane.b32.xlu0 %v160, 111
  %v433 = vpop.permute.xlu0 %432
  %434 = vrot.lane.b32.xlu0 %v161, 111
  %v435 = vpop.permute.xlu0 %434
  %vm436 = vcmask 908288
  %v437 = vsel %vm436, %v433, %v435
  %vm439 = vcmask 908288
  %v442 = vsel %vm439, %v435, %v433
  %v444 = vsel %vm51, 1, 0
  %v445 = vsel %vm52, 1, 0
  %vm446 = vcmp.eq.s32.totalorder %v444, 1
  %vm447 = vcmp.eq.s32.totalorder %v445, 1
  %vm448 = vmpackc.low %vm447, %vm446
  %v449 = vsel %vm448, 65537, 0
  %v450 = vlaneseq
  %v451 = vshrl.u32 %v450, 7
  %v452 = vsub.s32 0, %v451
  %v453 = vrot.slane %v449, %v452
  %v454 = vlaneseq
  %v455 = vshrl.u32 %v454, 7
  %v456 = vsub.s32 4, %v455
  %v457 = vrot.slane %v449, %v456
  %vm458 = vcmp.ne.s16.totalorder %v453, 0
  %vm459 = vcmp.ne.s16.totalorder %v457, 0
  %v460 = vsel %vm458, %v437, 0
  %v461 = vsel %vm459, %v442, 0
  %v464 = vunpack.c.l.b16 %v460
  %v465 = vunpack.c.l.b16 %v461
  %v466 = vpack.c.b16 %v465, %v464
  %468 = vst [vmem:[#allocation2 + $0x20] sm:$0x33] %v466
  %v469 = vld [vmem:[#allocation2] sm:$0xff]
  %v470 = vld [vmem:[#allocation2 + $0x8] sm:$0xff]
  %v471 = vld [vmem:[#allocation2 + $0x10] sm:$0xff]
  %v472 = vld [vmem:[#allocation2 + $0x18] sm:$0xff]
  %v473 = vld [vmem:[#allocation2 + $0x20] sm:$0x33]
  %v474 = vld [vmem:[%s5] sm:$0x3]
  %v475 = vld [vmem:[%s6] sm:$0xf]
  %477 = vset.pattern.permute.xlu0 0
  %478 = vperm.xlu0 %477, %v475
  %v479 = vpop.permute.xlu0 %478
  %v486 = vunpack.c.l.b16 %v469
  %v487 = vunpack.c.h.b16 %v469
  %v488 = vunpack.c.l.b16 %v470
  %v489 = vunpack.c.h.b16 %v470
  %v490 = vunpack.c.l.b16 %v471
  %v491 = vunpack.c.h.b16 %v471
  %v492 = vunpack.c.l.b16 %v472
  %v493 = vunpack.c.h.b16 %v472
  %v494 = vunpack.c.l.b16 %v473
  %v495 = vunpack.c.h.b16 %v473
  %v496 = vpack.c.b16 %v488, %v486
  %v497 = vpack.c.b16 %v489, %v487
  %v498 = vpack.c.b16 %v492, %v490
  %v499 = vpack.c.b16 %v493, %v491
  %v500 = vpack.c.b16 %v494, %v494
  %v501 = vpack.c.b16 %v495, %v495
  %vm506 = vcmask 293888
  %v508 = vsel %vm506, %v474, 0
  %v511 = vsel %vm92, %v500, 0
  %v514 = vsel %vm92, %v501, 0
  %516 = vmatprep.subr.bf16.mxu0 0
  %517 = vmatpush1.bf16.msra.mxu0 0
  %518 = vmatprep.subr.bf16.mxu0 0
  %519 = vmatpush1.bf16.msra.mxu0 0
  %520 = vmatprep.subr.bf16.mxu0 0
  %521 = vmatpush1.bf16.msra.mxu0 0
  %522 = vmatprep.subr.bf16.mxu0 0
  %523 = vmatpush1.bf16.msra.mxu0 0
  %524 = vmatprep.subr.bf16.mxu0 0
  %525 = vmatpush1.bf16.msra.mxu0 0
  %526 = vmatprep.subr.bf16.mxu0 %v514
  %527 = vmatpush1.bf16.msra.mxu0 %v511
  %528 = vmatprep.subr.bf16.mxu0 %v499
  %529 = vmatpush1.bf16.msra.mxu0 %v498
  %530 = vmatprep.subr.bf16.mxu0 %v497
  %531 = vmatpush1.bf16.msra.mxu0 %v496
  %532 = vmatprep.subr.bf16.mxu0 0
  %533 = vmatpush2.bf16.msra.mxu0 0
  %534 = vmatprep.subr.bf16.mxu0 0
  %535 = vmatpush2.bf16.msra.mxu0 0
  %536 = vmatprep.subr.bf16.mxu0 0
  %537 = vmatpush2.bf16.msra.mxu0 0
  %538 = vmatprep.subr.bf16.mxu0 0
  %539 = vmatpush2.bf16.msra.mxu0 0
  %540 = vmatprep.subr.bf16.mxu0 0
  %541 = vmatpush2.bf16.msra.mxu0 0
  %542 = vmatprep.subr.bf16.mxu0 0
  %543 = vmatpush2.bf16.msra.mxu0 0
  %544 = vmatprep.subr.bf16.mxu0 0
  %545 = vmatpush2.bf16.msra.mxu0 0
  %546 = vmatprep.subr.bf16.mxu0 0
  %547 = vmatpush2.bf16.msra.mxu0 0
  %548 = vmatprep.mubr.bf16.mxu0 0
  %549 = vmatmul.mubr.bf16.gmra.mxu0 %v508
  %v550 = vpop.f32.mrf.mxu0
  %v551 = vadd.f32 %v479, %v550
  %v552 = vpop.f32.mrf.mxu0
  %v553 = vadd.f32 %v479, %v552
  %v554 = vpop.f32.mrf.mxu0
  %v555 = vpop.f32.mrf.mxu0
  %556 = vdwg.mxu0
  %v557 = vmax.f32 %v551, 0.0
  %v558 = vmax.f32 %v553, 0.0
  %v559 = vld [vmem:[%s7] sm:$0xf]
  %v560 = vld [vmem:[%s7 + $0x4] sm:$0xf]
  %v561 = vpack.c.bf16 %v557, %v557
  %v562 = vpack.c.bf16 %v558, %v558
  %v565 = vunpack.c.l.b16 %v559
  %v566 = vunpack.c.l.b16 %v560
  %v567 = vpack.c.b16 %v566, %v565
  %v569 = vsel %vm85, %v567, 0
  %v572 = vsel %vm92, %v561, 0
  %v575 = vsel %vm92, %v562, 0
  %577 = vmatprep.subr.bf16.mxu0 0
  %578 = vmatpush1.bf16.msra.mxu0 0
  %579 = vmatprep.subr.bf16.mxu0 0
  %580 = vmatpush1.bf16.msra.mxu0 0
  %581 = vmatprep.subr.bf16.mxu0 0
  %582 = vmatpush1.bf16.msra.mxu0 0
  %583 = vmatprep.subr.bf16.mxu0 0
  %584 = vmatpush1.bf16.msra.mxu0 0
  %585 = vmatprep.subr.bf16.mxu0 0
  %586 = vmatpush1.bf16.msra.mxu0 0
  %587 = vmatprep.subr.bf16.mxu0 0
  %588 = vmatpush1.bf16.msra.mxu0 0
  %589 = vmatprep.subr.bf16.mxu0 0
  %590 = vmatpush1.bf16.msra.mxu0 0
  %591 = vmatprep.subr.bf16.mxu0 %v575
  %592 = vmatpush1.bf16.msra.mxu0 %v572
  %593 = vmatprep.subr.bf16.mxu0 0
  %594 = vmatpush2.bf16.msra.mxu0 0
  %595 = vmatprep.subr.bf16.mxu0 0
  %596 = vmatpush2.bf16.msra.mxu0 0
  %597 = vmatprep.subr.bf16.mxu0 0
  %598 = vmatpush2.bf16.msra.mxu0 0
  %599 = vmatprep.subr.bf16.mxu0 0
  %600 = vmatpush2.bf16.msra.mxu0 0
  %601 = vmatprep.subr.bf16.mxu0 0
  %602 = vmatpush2.bf16.msra.mxu0 0
  %603 = vmatprep.subr.bf16.mxu0 0
  %604 = vmatpush2.bf16.msra.mxu0 0
  %605 = vmatprep.subr.bf16.mxu0 0
  %606 = vmatpush2.bf16.msra.mxu0 0
  %607 = vmatprep.subr.bf16.mxu0 0
  %608 = vmatpush2.bf16.msra.mxu0 0
  %609 = vmatprep.mubr.bf16.mxu0 0
  %610 = vmatmul.mubr.bf16.gmra.mxu0 %v569
  %v611 = vpop.f32.mrf.mxu0
  %v612 = vadd.f32 %v134, %v611
  %v613 = vpop.f32.mrf.mxu0
  %v614 = vadd.f32 %v136, %v613
  %v615 = vpop.f32.mrf.mxu0
  %v616 = vadd.f32 %v138, %v615
  %v617 = vpop.f32.mrf.mxu0
  %v618 = vadd.f32 %v140, %v617
  %619 = vdwg.mxu0
  %620 = vst [vmem:[%s8] sm:$0xff] %v612
  %621 = vst [vmem:[%s8 + $0x8] sm:$0xff] %v614
  %622 = vst [vmem:[%s8 + $0x10] sm:$0xff] %v616
  %623 = vst [vmem:[%s8 + $0x18] sm:$0xff] %v618
  %s624 = scalar_lea.vmem %s0, 8
  %v625 = vld [vmem:[%s624] sm:$0xff]
  %v626 = vld [vmem:[%s2] sm:$0xf]
  %628 = vset.pattern.permute.xlu0 0
  %629 = vperm.xlu0 %628, %v626
  %v630 = vpop.permute.xlu0 %629
  %v632 = vunpack.c.l.s4 839922192
  %v633 = vunpack.c.0.s8 %v632
  %v634 = vlaneseq
  %v635 = vshrl.u32 %v634, 7
  %v636 = vsub.s32 %v633, %v635
  %v637 = vrot.slane %v630, %v636
  %v639 = vadd.f32 %v625, %v637
  %v640 = vmax.f32 %v639, 0.0
  %v641 = vld [vmem:[%s3] sm:$0xf]
  %v642 = vld [vmem:[%s3 + $0x4] sm:$0xf]
  %v643 = vld [vmem:[%s3 + $0x8] sm:$0x3]
  %v645 = vcombine.high %v640, %v640
  %v647 = vpack.c.bf16 %v640, %v640
  %v648 = vpack.c.bf16 %v645, %v645
  %v652 = vunpack.c.l.b16 %v641
  %v653 = vunpack.c.l.b16 %v642
  %v654 = vunpack.c.l.b16 %v643
  %v655 = vpack.c.b16 %v653, %v652
  %v656 = vpack.c.b16 %v654, %v654
  %v658 = vsel %vm85, %v655, 0
  %v661 = vsel %vm85, %v656, 0
  %v664 = vsel %vm92, %v647, 0
  %v667 = vsel %vm92, %v648, 0
  %669 = vmatprep.subr.bf16.mxu0 0
  %670 = vmatpush1.bf16.msra.mxu0 0
  %671 = vmatprep.subr.bf16.mxu0 0
  %672 = vmatpush1.bf16.msra.mxu0 0
  %673 = vmatprep.subr.bf16.mxu0 0
  %674 = vmatpush1.bf16.msra.mxu0 0
  %675 = vmatprep.subr.bf16.mxu0 0
  %676 = vmatpush1.bf16.msra.mxu0 0
  %677 = vmatprep.subr.bf16.mxu0 0
  %678 = vmatpush1.bf16.msra.mxu0 0
  %679 = vmatprep.subr.bf16.mxu0 0
  %680 = vmatpush1.bf16.msra.mxu0 0
  %681 = vmatprep.subr.bf16.mxu0 0
  %682 = vmatpush1.bf16.msra.mxu0 0
  %683 = vmatprep.subr.bf16.mxu0 %v667
  %684 = vmatpush1.bf16.msra.mxu0 %v664
  %685 = vmatprep.subr.bf16.mxu0 0
  %686 = vmatpush2.bf16.msra.mxu0 0
  %687 = vmatprep.subr.bf16.mxu0 0
  %688 = vmatpush2.bf16.msra.mxu0 0
  %689 = vmatprep.subr.bf16.mxu0 0
  %690 = vmatpush2.bf16.msra.mxu0 0
  %691 = vmatprep.subr.bf16.mxu0 0
  %692 = vmatpush2.bf16.msra.mxu0 0
  %693 = vmatprep.subr.bf16.mxu0 0
  %694 = vmatpush2.bf16.msra.mxu0 0
  %695 = vmatprep.subr.bf16.mxu0 0
  %696 = vmatpush2.bf16.msra.mxu0 0
  %697 = vmatprep.subr.bf16.mxu0 0
  %698 = vmatpush2.bf16.msra.mxu0 0
  %699 = vmatprep.subr.bf16.mxu0 0
  %700 = vmatpush2.bf16.msra.mxu0 0
  %701 = vmatprep.mubr.bf16.mxu0 0
  %702 = vmatmul.mubr.bf16.gmra.mxu0 %v658
  %v703 = vpop.f32.mrf.mxu0
  %v704 = vadd.f32 0.0, %v703
  %v705 = vpop.f32.mrf.mxu0
  %v706 = vadd.f32 0.0, %v705
  %v707 = vpop.f32.mrf.mxu0
  %v708 = vadd.f32 0.0, %v707
  %v709 = vpop.f32.mrf.mxu0
  %v710 = vadd.f32 0.0, %v709
  %711 = vmatprep.mubr.bf16.mxu0 0
  %712 = vmatmul.mubr.bf16.gmra.mxu0 %v661
  %v713 = vpop.f32.mrf.mxu0
  %v714 = vadd.f32 0.0, %v713
  %v715 = vpop.f32.mrf.mxu0
  %v716 = vadd.f32 0.0, %v715
  %v717 = vpop.f32.mrf.mxu0
  %v718 = vpop.f32.mrf.mxu0
  %719 = vdwg.mxu0
  %v720 = vld [vmem:[%s4] sm:$0xf]
  %722 = vset.pattern.permute.xlu0 0
  %723 = vperm.xlu0 %722, %v720
  %v724 = vpop.permute.xlu0 %723
  %v726 = vadd.f32 %v714, %v724
  %v727 = vadd.f32 %v716, %v724
  %v728 = vmax.f32 %v726, 0.0
  %v729 = vmax.f32 %v727, 0.0
  %v730 = vpack.c.bf16 %v728, %v728
  %v731 = vpack.c.bf16 %v729, %v729
  %733 = vrot.lane.b32.xlu0 %v731, 17
  %v734 = vpop.permute.xlu0 %733
  %736 = vrot.lane.b32.xlu0 %v730, 17
  %v737 = vpop.permute.xlu0 %736
  %v738 = vsel %vm168, %v737, %v734
  %v742 = vsel %vm171, %v734, %v737
  %v744 = vsel %vm190, %v742, 0
  %v745 = vsel %vm191, %v738, 0
  %v748 = vunpack.c.l.b16 %v744
  %v749 = vunpack.c.l.b16 %v745
  %v750 = vpack.c.b16 %v749, %v748
  %752 = vst [vmem:[#allocation2] sm:$0x33] %v750
  %753 = vrot.lane.b32.xlu0 %v731, 16
  %v754 = vpop.permute.xlu0 %753
  %755 = vrot.lane.b32.xlu0 %v730, 16
  %v756 = vpop.permute.xlu0 %755
  %v757 = vsel %vm205, %v756, %v754
  %v761 = vsel %vm208, %v754, %v756
  %v763 = vsel %vm227, %v761, 0
  %v764 = vsel %vm228, %v757, 0
  %v767 = vunpack.c.l.b16 %v763
  %v768 = vunpack.c.l.b16 %v764
  %v769 = vpack.c.b16 %v768, %v767
  %v770 = vrot.slane %v769, 6
  %772 = vst [vmem:[#allocation2] sm:$0xcc] %v770
  %773 = vrot.lane.b32.xlu0 %v731, 15
  %v774 = vpop.permute.xlu0 %773
  %775 = vrot.lane.b32.xlu0 %v730, 15
  %v776 = vpop.permute.xlu0 %775
  %v777 = vsel %vm243, %v776, %v774
  %v781 = vsel %vm246, %v774, %v776
  %v783 = vsel %vm265, %v781, 0
  %v784 = vsel %vm266, %v777, 0
  %v787 = vunpack.c.l.b16 %v783
  %v788 = vunpack.c.l.b16 %v784
  %v789 = vpack.c.b16 %v788, %v787
  %791 = vst [vmem:[#allocation2 + $0x8] sm:$0x33] %v789
  %792 = vrot.lane.b32.xlu0 %v731, 1
  %v793 = vpop.permute.xlu0 %792
  %794 = vrot.lane.b32.xlu0 %v730, 1
  %v795 = vpop.permute.xlu0 %794
  %v796 = vsel %vm280, %v795, %v793
  %v800 = vsel %vm283, %v793, %v795
  %v802 = vsel %vm302, %v800, 0
  %v803 = vsel %vm303, %v796, 0
  %v806 = vunpack.c.l.b16 %v802
  %v807 = vunpack.c.l.b16 %v803
  %v808 = vpack.c.b16 %v807, %v806
  %v809 = vrot.slane %v808, 6
  %811 = vst [vmem:[#allocation2 + $0x8] sm:$0xcc] %v809
  %v812 = vunpack.c.l.b16 %v730
  %v813 = vunpack.c.l.b16 %v731
  %v814 = vpack.c.b16 %v813, %v812
  %816 = vst [vmem:[#allocation2 + $0x10] sm:$0x33] %v814
  %817 = vrot.lane.b32.xlu0 %v730, 127
  %v818 = vpop.permute.xlu0 %817
  %819 = vrot.lane.b32.xlu0 %v731, 127
  %v820 = vpop.permute.xlu0 %819
  %v821 = vsel %vm323, %v818, %v820
  %v825 = vsel %vm326, %v820, %v818
  %v827 = vsel %vm345, %v821, 0
  %v828 = vsel %vm346, %v825, 0
  %v831 = vunpack.c.l.b16 %v827
  %v832 = vunpack.c.l.b16 %v828
  %v833 = vpack.c.b16 %v832, %v831
  %v834 = vrot.slane %v833, 6
  %836 = vst [vmem:[#allocation2 + $0x10] sm:$0xcc] %v834
  %837 = vrot.lane.b32.xlu0 %v730, 113
  %v838 = vpop.permute.xlu0 %837
  %839 = vrot.lane.b32.xlu0 %v731, 113
  %v840 = vpop.permute.xlu0 %839
  %v841 = vsel %vm361, %v838, %v840
  %v845 = vsel %vm364, %v840, %v838
  %v847 = vsel %vm383, %v841, 0
  %v848 = vsel %vm384, %v845, 0
  %v851 = vunpack.c.l.b16 %v847
  %v852 = vunpack.c.l.b16 %v848
  %v853 = vpack.c.b16 %v852, %v851
  %855 = vst [vmem:[#allocation2 + $0x18] sm:$0x33] %v853
  %856 = vrot.lane.b32.xlu0 %v730, 112
  %v857 = vpop.permute.xlu0 %856
  %858 = vrot.lane.b32.xlu0 %v731, 112
  %v859 = vpop.permute.xlu0 %858
  %v860 = vsel %vm398, %v857, %v859
  %v864 = vsel %vm401, %v859, %v857
  %v866 = vsel %vm420, %v860, 0
  %v867 = vsel %vm421, %v864, 0
  %v870 = vunpack.c.l.b16 %v866
  %v871 = vunpack.c.l.b16 %v867
  %v872 = vpack.c.b16 %v871, %v870
  %v873 = vrot.slane %v872, 6
  %875 = vst [vmem:[#allocation2 + $0x18] sm:$0xcc] %v873
  %876 = vrot.lane.b32.xlu0 %v730, 111
  %v877 = vpop.permute.xlu0 %876
  %878 = vrot.lane.b32.xlu0 %v731, 111
  %v879 = vpop.permute.xlu0 %878
  %v880 = vsel %vm436, %v877, %v879
  %v884 = vsel %vm439, %v879, %v877
  %v886 = vsel %vm458, %v880, 0
  %v887 = vsel %vm459, %v884, 0
  %v890 = vunpack.c.l.b16 %v886
  %v891 = vunpack.c.l.b16 %v887
  %v892 = vpack.c.b16 %v891, %v890
  %894 = vst [vmem:[#allocation2 + $0x20] sm:$0x33] %v892
  %v895 = vld [vmem:[#allocation2] sm:$0xff]
  %v896 = vld [vmem:[#allocation2 + $0x8] sm:$0xff]
  %v897 = vld [vmem:[#allocation2 + $0x10] sm:$0xff]
  %v898 = vld [vmem:[#allocation2 + $0x18] sm:$0xff]
  %v899 = vld [vmem:[#allocation2 + $0x20] sm:$0x33]
  %v900 = vld [vmem:[%s5] sm:$0x3]
  %v901 = vld [vmem:[%s6] sm:$0xf]
  %903 = vset.pattern.permute.xlu0 0
  %904 = vperm.xlu0 %903, %v901
  %v905 = vpop.permute.xlu0 %904
  %v912 = vunpack.c.l.b16 %v895
  %v913 = vunpack.c.h.b16 %v895
  %v914 = vunpack.c.l.b16 %v896
  %v915 = vunpack.c.h.b16 %v896
  %v916 = vunpack.c.l.b16 %v897
  %v917 = vunpack.c.h.b16 %v897
  %v918 = vunpack.c.l.b16 %v898
  %v919 = vunpack.c.h.b16 %v898
  %v920 = vunpack.c.l.b16 %v899
  %v921 = vunpack.c.h.b16 %v899
  %v922 = vpack.c.b16 %v914, %v912
  %v923 = vpack.c.b16 %v915, %v913
  %v924 = vpack.c.b16 %v918, %v916
  %v925 = vpack.c.b16 %v919, %v917
  %v926 = vpack.c.b16 %v920, %v920
  %v927 = vpack.c.b16 %v921, %v921
  %v933 = vsel %vm506, %v900, 0
  %v936 = vsel %vm92, %v926, 0
  %v939 = vsel %vm92, %v927, 0
  %941 = vmatprep.subr.bf16.mxu0 0
  %942 = vmatpush1.bf16.msra.mxu0 0
  %943 = vmatprep.subr.bf16.mxu0 0
  %944 = vmatpush1.bf16.msra.mxu0 0
  %945 = vmatprep.subr.bf16.mxu0 0
  %946 = vmatpush1.bf16.msra.mxu0 0
  %947 = vmatprep.subr.bf16.mxu0 0
  %948 = vmatpush1.bf16.msra.mxu0 0
  %949 = vmatprep.subr.bf16.mxu0 0
  %950 = vmatpush1.bf16.msra.mxu0 0
  %951 = vmatprep.subr.bf16.mxu0 %v939
  %952 = vmatpush1.bf16.msra.mxu0 %v936
  %953 = vmatprep.subr.bf16.mxu0 %v925
  %954 = vmatpush1.bf16.msra.mxu0 %v924
  %955 = vmatprep.subr.bf16.mxu0 %v923
  %956 = vmatpush1.bf16.msra.mxu0 %v922
  %957 = vmatprep.subr.bf16.mxu0 0
  %958 = vmatpush2.bf16.msra.mxu0 0
  %959 = vmatprep.subr.bf16.mxu0 0
  %960 = vmatpush2.bf16.msra.mxu0 0
  %961 = vmatprep.subr.bf16.mxu0 0
  %962 = vmatpush2.bf16.msra.mxu0 0
  %963 = vmatprep.subr.bf16.mxu0 0
  %964 = vmatpush2.bf16.msra.mxu0 0
  %965 = vmatprep.subr.bf16.mxu0 0
  %966 = vmatpush2.bf16.msra.mxu0 0
  %967 = vmatprep.subr.bf16.mxu0 0
  %968 = vmatpush2.bf16.msra.mxu0 0
  %969 = vmatprep.subr.bf16.mxu0 0
  %970 = vmatpush2.bf16.msra.mxu0 0
  %971 = vmatprep.subr.bf16.mxu0 0
  %972 = vmatpush2.bf16.msra.mxu0 0
  %973 = vmatprep.mubr.bf16.mxu0 0
  %974 = vmatmul.mubr.bf16.gmra.mxu0 %v933
  %v975 = vpop.f32.mrf.mxu0
  %v976 = vadd.f32 %v905, %v975
  %v977 = vpop.f32.mrf.mxu0
  %v978 = vadd.f32 %v905, %v977
  %v979 = vpop.f32.mrf.mxu0
  %v980 = vpop.f32.mrf.mxu0
  %981 = vdwg.mxu0
  %v982 = vmax.f32 %v976, 0.0
  %v983 = vmax.f32 %v978, 0.0
  %v984 = vld [vmem:[%s7] sm:$0xf]
  %v985 = vld [vmem:[%s7 + $0x4] sm:$0xf]
  %v986 = vpack.c.bf16 %v982, %v982
  %v987 = vpack.c.bf16 %v983, %v983
  %v990 = vunpack.c.l.b16 %v984
  %v991 = vunpack.c.l.b16 %v985
  %v992 = vpack.c.b16 %v991, %v990
  %v994 = vsel %vm85, %v992, 0
  %v997 = vsel %vm92, %v986, 0
  %v1000 = vsel %vm92, %v987, 0
  %1002 = vmatprep.subr.bf16.mxu0 0
  %1003 = vmatpush1.bf16.msra.mxu0 0
  %1004 = vmatprep.subr.bf16.mxu0 0
  %1005 = vmatpush1.bf16.msra.mxu0 0
  %1006 = vmatprep.subr.bf16.mxu0 0
  %1007 = vmatpush1.bf16.msra.mxu0 0
  %1008 = vmatprep.subr.bf16.mxu0 0
  %1009 = vmatpush1.bf16.msra.mxu0 0
  %1010 = vmatprep.subr.bf16.mxu0 0
  %1011 = vmatpush1.bf16.msra.mxu0 0
  %1012 = vmatprep.subr.bf16.mxu0 0
  %1013 = vmatpush1.bf16.msra.mxu0 0
  %1014 = vmatprep.subr.bf16.mxu0 0
  %1015 = vmatpush1.bf16.msra.mxu0 0
  %1016 = vmatprep.subr.bf16.mxu0 %v1000
  %1017 = vmatpush1.bf16.msra.mxu0 %v997
  %1018 = vmatprep.subr.bf16.mxu0 0
  %1019 = vmatpush2.bf16.msra.mxu0 0
  %1020 = vmatprep.subr.bf16.mxu0 0
  %1021 = vmatpush2.bf16.msra.mxu0 0
  %1022 = vmatprep.subr.bf16.mxu0 0
  %1023 = vmatpush2.bf16.msra.mxu0 0
  %1024 = vmatprep.subr.bf16.mxu0 0
  %1025 = vmatpush2.bf16.msra.mxu0 0
  %1026 = vmatprep.subr.bf16.mxu0 0
  %1027 = vmatpush2.bf16.msra.mxu0 0
  %1028 = vmatprep.subr.bf16.mxu0 0
  %1029 = vmatpush2.bf16.msra.mxu0 0
  %1030 = vmatprep.subr.bf16.mxu0 0
  %1031 = vmatpush2.bf16.msra.mxu0 0
  %1032 = vmatprep.subr.bf16.mxu0 0
  %1033 = vmatpush2.bf16.msra.mxu0 0
  %1034 = vmatprep.mubr.bf16.mxu0 0
  %1035 = vmatmul.mubr.bf16.gmra.mxu0 %v994
  %v1036 = vpop.f32.mrf.mxu0
  %v1037 = vadd.f32 %v704, %v1036
  %v1038 = vpop.f32.mrf.mxu0
  %v1039 = vadd.f32 %v706, %v1038
  %v1040 = vpop.f32.mrf.mxu0
  %v1041 = vadd.f32 %v708, %v1040
  %v1042 = vpop.f32.mrf.mxu0
  %v1043 = vadd.f32 %v710, %v1042
  %1044 = vdwg.mxu0
  %s1045 = scalar_lea.vmem %s8, 32
  %1046 = vst [vmem:[%s1045] sm:$0xff] %v1037
  %1047 = vst [vmem:[%s1045 + $0x8] sm:$0xff] %v1039
  %1048 = vst [vmem:[%s1045 + $0x10] sm:$0xff] %v1041
  %1049 = vst [vmem:[%s1045 + $0x18] sm:$0xff] %v1043
  // Predicated region
  $region34: #{_forward.1} parent=0 // pred_check
    _
  $region35: #{_forward.1} parent=0 // pred_check_branch
    %1051 = sbr.rel (0) target = $region37
  $region36: #{_forward.1} parent=0 // pred_region
    _
  $region37: #{_forward.1} parent=0 // pred_fallthru
    _
  // Predicated region
  $region38: #{_forward.1} parent=0 // pred_check
    _
  $region39: #{_forward.1} parent=0 // pred_check_branch
    %1053 = sbr.rel (0) target = $region41
  $region40: #{_forward.1} parent=0 // pred_region
    _
  $region41: #{_forward.1} parent=0 // pred_fallthru
    _

</llo_original>
